<compile_context>
chip_gen: v7x
topology: tpu7x:2x2x1
jax: 0.10.0
libtpu: 0.0.40
codegen_flags: <defaults>
</compile_context>

<pallas_src>
import functools

import jax
import jax.numpy as jnp
from jax.experimental import pallas as pl
from jax.experimental.pallas import tpu as pltpu


def _layer_norm(x, gamma, beta, eps=1e-5):
    mu = jnp.mean(x, axis=-1, keepdims=True)
    var = jnp.mean((x - mu) * (x - mu), axis=-1, keepdims=True)
    inv = jax.lax.rsqrt(var + eps)
    return (x - mu) * inv * gamma + beta


def encoder_layer_kernel(
    x_ref,                                   # (1, S, E)  f32
    wq_ref, wk_ref, wv_ref, wo_ref,          # (E, E)     bf16, pre-transposed (in, out)
    w1_ref, w2_ref,                          # (E, 4E), (4E, E)  bf16, pre-transposed
    bq_ref, bk_ref, bv_ref, bo_ref,          # (1, E)     f32
    bf1_ref, bf2_ref,                        # (1, 4E), (1, E)   f32
    g1_ref, be1_ref, g2_ref, be2_ref,        # (1, E)     f32  (LayerNorm 1 / 2)
    o_ref,                                   # (1, S, E)  f32
    *, num_heads,
):
    x = x_ref[0]                             # (S, E) f32
    S, E = x.shape
    H = num_heads
    Dh = E // H
    scale = 1.0 / (Dh ** 0.5)

    # ---- hoist small per-row parameters (loaded exactly once) ------------
    bq = bq_ref[...]
    bk = bk_ref[...]
    bv = bv_ref[...]
    bo = bo_ref[...]
    bf1 = bf1_ref[...]
    bf2 = bf2_ref[...]
    g1 = g1_ref[...]
    be1 = be1_ref[...]
    g2 = g2_ref[...]
    be2 = be2_ref[...]

    x_bf = x.astype(jnp.bfloat16)

    # ---- multi-head self attention ---------------------------------------
    # Weights are already W^T (in_features, out_features): no in-kernel transpose.
    q = jnp.dot(x_bf, wq_ref[...], preferred_element_type=jnp.float32) + bq
    k = jnp.dot(x_bf, wk_ref[...], preferred_element_type=jnp.float32) + bk
    v = jnp.dot(x_bf, wv_ref[...], preferred_element_type=jnp.float32) + bv

    # scale q (smaller tensor than scores) before the score matmul
    q3 = jnp.transpose(q.reshape(S, H, Dh), (1, 0, 2)) * scale   # (H, S, Dh) f32
    k3 = jnp.transpose(k.reshape(S, H, Dh), (1, 0, 2))           # (H, S, Dh) f32
    v3 = jnp.transpose(v.reshape(S, H, Dh), (1, 0, 2))           # (H, S, Dh) f32

    scores = jnp.einsum('hqd,hkd->hqk',
                        q3.astype(jnp.bfloat16), k3.astype(jnp.bfloat16),
                        preferred_element_type=jnp.float32)      # (H, S, S) f32

    # Un-normalized softmax: normalize the (H,S,Dh) context, not the (H,S,S) probs.
    m = jnp.max(scores, axis=-1, keepdims=True)
    p = jnp.exp(scores - m)                                      # (H, S, S) f32
    l = jnp.sum(p, axis=-1, keepdims=True)                       # (H, S, 1) f32

    ctx = jnp.einsum('hqk,hkd->hqd',
                     p.astype(jnp.bfloat16), v3.astype(jnp.bfloat16),
                     preferred_element_type=jnp.float32)         # (H, S, Dh) f32
    ctx = ctx * pl.reciprocal(l, approx=True)
    ctx = jnp.transpose(ctx, (1, 0, 2)).reshape(S, E)

    attn_out = jnp.dot(ctx.astype(jnp.bfloat16), wo_ref[...],
                       preferred_element_type=jnp.float32) + bo

    # ---- residual + LayerNorm 1 ------------------------------------------
    x1 = _layer_norm(x + attn_out, g1, be1)

    # ---- FFN ---------------------------------------------------------------
    h = jnp.dot(x1.astype(jnp.bfloat16), w1_ref[...],
                preferred_element_type=jnp.float32) + bf1
    h = jnp.maximum(h, 0.0)
    f = jnp.dot(h.astype(jnp.bfloat16), w2_ref[...],
                preferred_element_type=jnp.float32) + bf2

    # ---- residual + LayerNorm 2 ------------------------------------------
    x2 = _layer_norm(x1 + f, g2, be2)

    o_ref[0] = x2.astype(o_ref.dtype)


def transformer_encoder_layer(x_snb, params, num_heads):
    """x_snb: (seq_len, batch, hidden) float32 — PyTorch MultiheadAttention layout."""
    S, N, E = x_snb.shape
    x = jnp.transpose(x_snb, (1, 0, 2))      # (N, S, E)

    (wq, bq, wk, bk, wv, bv, wo, bo,
     g1, be1, w1, bf1, w2, bf2, g2, be2) = params

    # Pre-transpose weights once (outside the grid loop) and cast to bf16 so
    # the MXU consumes them in natural layout with halved DMA / VMEM traffic.
    mm_dtype = jnp.bfloat16
    wq_t = wq.T.astype(mm_dtype)             # (E, E)
    wk_t = wk.T.astype(mm_dtype)             # (E, E)
    wv_t = wv.T.astype(mm_dtype)             # (E, E)
    wo_t = wo.T.astype(mm_dtype)             # (E, E)
    w1_t = w1.T.astype(mm_dtype)             # (E, 4E)
    w2_t = w2.T.astype(mm_dtype)             # (4E, E)

    param_list = [wq_t, wk_t, wv_t, wo_t, w1_t, w2_t,
                  bq, bk, bv, bo, bf1, bf2,
                  g1, be1, g2, be2]

    def full_spec(arr):
        # grid-invariant: whole array, constant block index
        return pl.BlockSpec(arr.shape, lambda b: (0, 0))

    out = pl.pallas_call(
        functools.partial(encoder_layer_kernel, num_heads=num_heads),
        out_shape=jax.ShapeDtypeStruct((N, S, E), jnp.float32),
        grid_spec=pltpu.PrefetchScalarGridSpec(
            num_scalar_prefetch=0,
            grid=(N,),
            in_specs=[pl.BlockSpec((1, S, E), lambda b: (b, 0, 0))]
                     + [full_spec(p) for p in param_list],
            out_specs=pl.BlockSpec((1, S, E), lambda b: (b, 0, 0)),
        ),
        compiler_params=pltpu.CompilerParams(
            dimension_semantics=("parallel",),
            vmem_limit_bytes=32 * 1024 * 1024,
        ),
    )(x, *param_list)

    return jnp.transpose(out, (1, 0, 2))     # back to (S, N, E)


def init_params(key, hidden, num_heads):
    E = hidden
    ks = jax.random.split(key, 16)
    s = 0.1

    def w(k, shape):
        return (s * jax.random.normal(k, shape)).astype(jnp.float32)

    # MultiheadAttention: in_proj (3E, E) split into q/k/v, out_proj (E, E)
    wq = w(ks[0], (E, E)); bq = w(ks[1], (1, E))
    wk = w(ks[2], (E, E)); bk = w(ks[3], (1, E))
    wv = w(ks[4], (E, E)); bv = w(ks[5], (1, E))
    wo = w(ks[6], (E, E)); bo = w(ks[7], (1, E))
    # LayerNorm1
    g1 = jnp.ones((1, E), jnp.float32); be1 = jnp.zeros((1, E), jnp.float32)
    # FFN: Linear(E, 4E), Linear(4E, E)   (PyTorch layout: (out, in))
    w1 = w(ks[8], (4 * E, E)); bf1 = w(ks[9], (1, 4 * E))
    w2 = w(ks[10], (E, 4 * E)); bf2 = w(ks[11], (1, E))
    # LayerNorm2
    g2 = jnp.ones((1, E), jnp.float32); be2 = jnp.zeros((1, E), jnp.float32)

    return (wq, bq, wk, bk, wv, bv, wo, bo,
            g1, be1, w1, bf1, w2, bf2, g2, be2)


if __name__ == "__main__":
    seq_len, batch, hidden, num_heads = 8, 2, 32, 4

    key = jax.random.PRNGKey(0)
    kx, kp = jax.random.split(key)
    x = jax.random.normal(kx, (seq_len, batch, hidden), dtype=jnp.float32)
    params = init_params(kp, hidden, num_heads)

    out = transformer_encoder_layer(x, params, num_heads)
    out = jax.block_until_ready(out)
    assert out.shape == (seq_len, batch, hidden)
    assert bool(jnp.all(jnp.isfinite(out)))
    print("KERNEL_OK")
</pallas_src>

<mosaic_0001>
module attributes {stable_mosaic.version = 11 : i64} {
  func.func @encoder_layer_kernel(%arg0: i32, %arg1: memref<1x8x32xf32, #tpu.memory_space<vmem>>, %arg2: memref<32x32xbf16, #tpu.memory_space<vmem>>, %arg3: memref<32x32xbf16, #tpu.memory_space<vmem>>, %arg4: memref<32x32xbf16, #tpu.memory_space<vmem>>, %arg5: memref<32x32xbf16, #tpu.memory_space<vmem>>, %arg6: memref<32x128xbf16, #tpu.memory_space<vmem>>, %arg7: memref<128x32xbf16, #tpu.memory_space<vmem>>, %arg8: memref<1x32xf32, #tpu.memory_space<vmem>>, %arg9: memref<1x32xf32, #tpu.memory_space<vmem>>, %arg10: memref<1x32xf32, #tpu.memory_space<vmem>>, %arg11: memref<1x32xf32, #tpu.memory_space<vmem>>, %arg12: memref<1x128xf32, #tpu.memory_space<vmem>>, %arg13: memref<1x32xf32, #tpu.memory_space<vmem>>, %arg14: memref<1x32xf32, #tpu.memory_space<vmem>>, %arg15: memref<1x32xf32, #tpu.memory_space<vmem>>, %arg16: memref<1x32xf32, #tpu.memory_space<vmem>>, %arg17: memref<1x32xf32, #tpu.memory_space<vmem>>, %arg18: memref<1x8x32xf32, #tpu.memory_space<vmem>>) attributes {dimension_semantics = [#tpu.dimension_semantics<parallel>], iteration_bounds = array<i64: 2>, scalar_prefetch = 0 : i64, scratch_operands = 0 : i64, tpu.core_type = #tpu.core_type<tc>, window_params = [{transform_indices = @transform_0, window_bounds = array<i64: 1, 8, 32>}, {pipeline_mode = #tpu.pipeline_mode<synchronous>, transform_indices = @transform_1, window_bounds = array<i64: 32, 32>}, {pipeline_mode = #tpu.pipeline_mode<synchronous>, transform_indices = @transform_2, window_bounds = array<i64: 32, 32>}, {pipeline_mode = #tpu.pipeline_mode<synchronous>, transform_indices = @transform_3, window_bounds = array<i64: 32, 32>}, {pipeline_mode = #tpu.pipeline_mode<synchronous>, transform_indices = @transform_4, window_bounds = array<i64: 32, 32>}, {pipeline_mode = #tpu.pipeline_mode<synchronous>, transform_indices = @transform_5, window_bounds = array<i64: 32, 128>}, {pipeline_mode = #tpu.pipeline_mode<synchronous>, transform_indices = @transform_6, window_bounds = array<i64: 128, 32>}, {pipeline_mode = #tpu.pipeline_mode<synchronous>, transform_indices = @transform_7, window_bounds = array<i64: 1, 32>}, {pipeline_mode = #tpu.pipeline_mode<synchronous>, transform_indices = @transform_8, window_bounds = array<i64: 1, 32>}, {pipeline_mode = #tpu.pipeline_mode<synchronous>, transform_indices = @transform_9, window_bounds = array<i64: 1, 32>}, {pipeline_mode = #tpu.pipeline_mode<synchronous>, transform_indices = @transform_10, window_bounds = array<i64: 1, 32>}, {pipeline_mode = #tpu.pipeline_mode<synchronous>, transform_indices = @transform_11, window_bounds = array<i64: 1, 128>}, {pipeline_mode = #tpu.pipeline_mode<synchronous>, transform_indices = @transform_12, window_bounds = array<i64: 1, 32>}, {pipeline_mode = #tpu.pipeline_mode<synchronous>, transform_indices = @transform_13, window_bounds = array<i64: 1, 32>}, {pipeline_mode = #tpu.pipeline_mode<synchronous>, transform_indices = @transform_14, window_bounds = array<i64: 1, 32>}, {pipeline_mode = #tpu.pipeline_mode<synchronous>, transform_indices = @transform_15, window_bounds = array<i64: 1, 32>}, {pipeline_mode = #tpu.pipeline_mode<synchronous>, transform_indices = @transform_16, window_bounds = array<i64: 1, 32>}, {transform_indices = @transform_17, window_bounds = array<i64: 1, 8, 32>}]} {
    %c0 = arith.constant 0 : index
    %c0_0 = arith.constant 0 : index
    %c0_1 = arith.constant 0 : index
    %0 = vector.load %arg1[%c0, %c0_0, %c0_1] : memref<1x8x32xf32, #tpu.memory_space<vmem>>, vector<1x8x32xf32>
    %1 = vector.shape_cast %0 : vector<1x8x32xf32> to vector<8x32xf32>
    %c0_2 = arith.constant 0 : index
    %c0_3 = arith.constant 0 : index
    %2 = vector.load %arg8[%c0_2, %c0_3] : memref<1x32xf32, #tpu.memory_space<vmem>>, vector<1x32xf32>
    %c0_4 = arith.constant 0 : index
    %c0_5 = arith.constant 0 : index
    %3 = vector.load %arg9[%c0_4, %c0_5] : memref<1x32xf32, #tpu.memory_space<vmem>>, vector<1x32xf32>
    %c0_6 = arith.constant 0 : index
    %c0_7 = arith.constant 0 : index
    %4 = vector.load %arg10[%c0_6, %c0_7] : memref<1x32xf32, #tpu.memory_space<vmem>>, vector<1x32xf32>
    %c0_8 = arith.constant 0 : index
    %c0_9 = arith.constant 0 : index
    %5 = vector.load %arg11[%c0_8, %c0_9] : memref<1x32xf32, #tpu.memory_space<vmem>>, vector<1x32xf32>
    %c0_10 = arith.constant 0 : index
    %c0_11 = arith.constant 0 : index
    %6 = vector.load %arg12[%c0_10, %c0_11] : memref<1x128xf32, #tpu.memory_space<vmem>>, vector<1x128xf32>
    %c0_12 = arith.constant 0 : index
    %c0_13 = arith.constant 0 : index
    %7 = vector.load %arg13[%c0_12, %c0_13] : memref<1x32xf32, #tpu.memory_space<vmem>>, vector<1x32xf32>
    %c0_14 = arith.constant 0 : index
    %c0_15 = arith.constant 0 : index
    %8 = vector.load %arg14[%c0_14, %c0_15] : memref<1x32xf32, #tpu.memory_space<vmem>>, vector<1x32xf32>
    %c0_16 = arith.constant 0 : index
    %c0_17 = arith.constant 0 : index
    %9 = vector.load %arg15[%c0_16, %c0_17] : memref<1x32xf32, #tpu.memory_space<vmem>>, vector<1x32xf32>
    %c0_18 = arith.constant 0 : index
    %c0_19 = arith.constant 0 : index
    %10 = vector.load %arg16[%c0_18, %c0_19] : memref<1x32xf32, #tpu.memory_space<vmem>>, vector<1x32xf32>
    %c0_20 = arith.constant 0 : index
    %c0_21 = arith.constant 0 : index
    %11 = vector.load %arg17[%c0_20, %c0_21] : memref<1x32xf32, #tpu.memory_space<vmem>>, vector<1x32xf32>
    %12 = arith.truncf %1 : vector<8x32xf32> to vector<8x32xbf16>
    %c0_22 = arith.constant 0 : index
    %c0_23 = arith.constant 0 : index
    %13 = vector.load %arg2[%c0_22, %c0_23] : memref<32x32xbf16, #tpu.memory_space<vmem>>, vector<32x32xbf16>
    %cst = arith.constant dense<0.000000e+00> : vector<8x32xf32>
    %14 = tpu.matmul %12, %13, %cst {dimension_numbers = #tpu.dot_dimension_numbers<[1], [0], [0], [1], [0, 0, 1, 1], [], []>} : vector<8x32xbf16>, vector<32x32xbf16>, vector<8x32xf32> -> vector<8x32xf32>
    %15 = vector.broadcast %2 : vector<1x32xf32> to vector<8x32xf32>
    %16 = arith.addf %14, %15 : vector<8x32xf32>
    %c0_24 = arith.constant 0 : index
    %c0_25 = arith.constant 0 : index
    %17 = vector.load %arg3[%c0_24, %c0_25] : memref<32x32xbf16, #tpu.memory_space<vmem>>, vector<32x32xbf16>
    %cst_26 = arith.constant dense<0.000000e+00> : vector<8x32xf32>
    %18 = tpu.matmul %12, %17, %cst_26 {dimension_numbers = #tpu.dot_dimension_numbers<[1], [0], [0], [1], [0, 0, 1, 1], [], []>} : vector<8x32xbf16>, vector<32x32xbf16>, vector<8x32xf32> -> vector<8x32xf32>
    %19 = vector.broadcast %3 : vector<1x32xf32> to vector<8x32xf32>
    %20 = arith.addf %18, %19 : vector<8x32xf32>
    %c0_27 = arith.constant 0 : index
    %c0_28 = arith.constant 0 : index
    %21 = vector.load %arg4[%c0_27, %c0_28] : memref<32x32xbf16, #tpu.memory_space<vmem>>, vector<32x32xbf16>
    %cst_29 = arith.constant dense<0.000000e+00> : vector<8x32xf32>
    %22 = tpu.matmul %12, %21, %cst_29 {dimension_numbers = #tpu.dot_dimension_numbers<[1], [0], [0], [1], [0, 0, 1, 1], [], []>} : vector<8x32xbf16>, vector<32x32xbf16>, vector<8x32xf32> -> vector<8x32xf32>
    %23 = vector.broadcast %4 : vector<1x32xf32> to vector<8x32xf32>
    %24 = arith.addf %22, %23 : vector<8x32xf32>
    %25 = vector.shape_cast %16 : vector<8x32xf32> to vector<8x4x8xf32>
    %26 = tpu.transpose %25, [1, 0, 2] : vector<8x4x8xf32> -> vector<4x8x8xf32>
    %cst_30 = arith.constant 0.353553385 : f32
    %27 = vector.broadcast %cst_30 : f32 to vector<4x8x8xf32>
    %28 = arith.mulf %26, %27 : vector<4x8x8xf32>
    %29 = vector.shape_cast %20 : vector<8x32xf32> to vector<8x4x8xf32>
    %30 = tpu.transpose %29, [1, 0, 2] : vector<8x4x8xf32> -> vector<4x8x8xf32>
    %31 = vector.shape_cast %24 : vector<8x32xf32> to vector<8x4x8xf32>
    %32 = tpu.transpose %31, [1, 0, 2] : vector<8x4x8xf32> -> vector<4x8x8xf32>
    %33 = arith.truncf %28 : vector<4x8x8xf32> to vector<4x8x8xbf16>
    %34 = arith.truncf %30 : vector<4x8x8xf32> to vector<4x8x8xbf16>
    "tpu.trace_start"() <{level = 10 : i32, message = "hqd,hkd->hqk"}> : () -> ()
    %cst_31 = arith.constant dense<0.000000e+00> : vector<4x8x8xf32>
    %35 = tpu.matmul %33, %34, %cst_31 {dimension_numbers = #tpu.dot_dimension_numbers<[2], [2], [1], [1], [0, 0, 0, 1, 1, 1], [0], [0]>} : vector<4x8x8xbf16>, vector<4x8x8xbf16>, vector<4x8x8xf32> -> vector<4x8x8xf32>
    "tpu.trace_stop"() : () -> ()
    %cst_32 = arith.constant dense<0xFF800000> : vector<4x8xf32>
    %36 = vector.multi_reduction <maximumf>, %35, %cst_32 [2] : vector<4x8x8xf32> to vector<4x8xf32>
    %37 = vector.shape_cast %36 : vector<4x8xf32> to vector<4x8x1xf32>
    %38 = vector.broadcast %37 : vector<4x8x1xf32> to vector<4x8x8xf32>
    %39 = arith.subf %35, %38 : vector<4x8x8xf32>
    %40 = math.exp %39 : vector<4x8x8xf32>
    %cst_33 = arith.constant dense<0.000000e+00> : vector<4x8xf32>
    %41 = vector.multi_reduction <add>, %40, %cst_33 [2] : vector<4x8x8xf32> to vector<4x8xf32>
    %42 = vector.shape_cast %41 : vector<4x8xf32> to vector<4x8x1xf32>
    %43 = arith.truncf %40 : vector<4x8x8xf32> to vector<4x8x8xbf16>
    %44 = arith.truncf %32 : vector<4x8x8xf32> to vector<4x8x8xbf16>
    "tpu.trace_start"() <{level = 10 : i32, message = "hqk,hkd->hqd"}> : () -> ()
    %cst_34 = arith.constant dense<0.000000e+00> : vector<4x8x8xf32>
    %45 = tpu.matmul %43, %44, %cst_34 {dimension_numbers = #tpu.dot_dimension_numbers<[2], [1], [1], [2], [0, 0, 0, 1, 1, 2], [0], [0]>} : vector<4x8x8xbf16>, vector<4x8x8xbf16>, vector<4x8x8xf32> -> vector<4x8x8xf32>
    "tpu.trace_stop"() : () -> ()
    %46 = tpu.reciprocal %42 {approx = true} : vector<4x8x1xf32> -> vector<4x8x1xf32>
    %47 = vector.broadcast %46 : vector<4x8x1xf32> to vector<4x8x8xf32>
    %48 = arith.mulf %45, %47 : vector<4x8x8xf32>
    %49 = tpu.transpose %48, [1, 0, 2] : vector<4x8x8xf32> -> vector<8x4x8xf32>
    %50 = vector.shape_cast %49 : vector<8x4x8xf32> to vector<8x32xf32>
    %51 = arith.truncf %50 : vector<8x32xf32> to vector<8x32xbf16>
    %c0_35 = arith.constant 0 : index
    %c0_36 = arith.constant 0 : index
    %52 = vector.load %arg5[%c0_35, %c0_36] : memref<32x32xbf16, #tpu.memory_space<vmem>>, vector<32x32xbf16>
    %cst_37 = arith.constant dense<0.000000e+00> : vector<8x32xf32>
    %53 = tpu.matmul %51, %52, %cst_37 {dimension_numbers = #tpu.dot_dimension_numbers<[1], [0], [0], [1], [0, 0, 1, 1], [], []>} : vector<8x32xbf16>, vector<32x32xbf16>, vector<8x32xf32> -> vector<8x32xf32>
    %54 = vector.broadcast %5 : vector<1x32xf32> to vector<8x32xf32>
    %55 = arith.addf %53, %54 : vector<8x32xf32>
    %56 = arith.addf %1, %55 : vector<8x32xf32>
    %cst_38 = arith.constant dense<0.000000e+00> : vector<8xf32>
    %57 = vector.multi_reduction <add>, %56, %cst_38 [1] : vector<8x32xf32> to vector<8xf32>
    %58 = vector.shape_cast %57 : vector<8xf32> to vector<8x1xf32>
    %cst_39 = arith.constant 3.200000e+01 : f32
    %59 = vector.broadcast %cst_39 : f32 to vector<8x1xf32>
    %60 = arith.divf %58, %59 : vector<8x1xf32>
    %61 = vector.broadcast %60 : vector<8x1xf32> to vector<8x32xf32>
    %62 = arith.subf %56, %61 : vector<8x32xf32>
    %63 = vector.broadcast %60 : vector<8x1xf32> to vector<8x32xf32>
    %64 = arith.subf %56, %63 : vector<8x32xf32>
    %65 = arith.mulf %62, %64 : vector<8x32xf32>
    %cst_40 = arith.constant dense<0.000000e+00> : vector<8xf32>
    %66 = vector.multi_reduction <add>, %65, %cst_40 [1] : vector<8x32xf32> to vector<8xf32>
    %67 = vector.shape_cast %66 : vector<8xf32> to vector<8x1xf32>
    %cst_41 = arith.constant 3.200000e+01 : f32
    %68 = vector.broadcast %cst_41 : f32 to vector<8x1xf32>
    %69 = arith.divf %67, %68 : vector<8x1xf32>
    %cst_42 = arith.constant 9.99999974E-6 : f32
    %70 = vector.broadcast %cst_42 : f32 to vector<8x1xf32>
    %71 = arith.addf %69, %70 : vector<8x1xf32>
    %72 = math.rsqrt %71 : vector<8x1xf32>
    %73 = vector.broadcast %60 : vector<8x1xf32> to vector<8x32xf32>
    %74 = arith.subf %56, %73 : vector<8x32xf32>
    %75 = vector.broadcast %72 : vector<8x1xf32> to vector<8x32xf32>
    %76 = arith.mulf %74, %75 : vector<8x32xf32>
    %77 = vector.broadcast %8 : vector<1x32xf32> to vector<8x32xf32>
    %78 = arith.mulf %76, %77 : vector<8x32xf32>
    %79 = vector.broadcast %9 : vector<1x32xf32> to vector<8x32xf32>
    %80 = arith.addf %78, %79 : vector<8x32xf32>
    %81 = arith.truncf %80 : vector<8x32xf32> to vector<8x32xbf16>
    %c0_43 = arith.constant 0 : index
    %c0_44 = arith.constant 0 : index
    %82 = vector.load %arg6[%c0_43, %c0_44] : memref<32x128xbf16, #tpu.memory_space<vmem>>, vector<32x128xbf16>
    %cst_45 = arith.constant dense<0.000000e+00> : vector<8x128xf32>
    %83 = tpu.matmul %81, %82, %cst_45 {dimension_numbers = #tpu.dot_dimension_numbers<[1], [0], [0], [1], [0, 0, 1, 1], [], []>} : vector<8x32xbf16>, vector<32x128xbf16>, vector<8x128xf32> -> vector<8x128xf32>
    %84 = vector.broadcast %6 : vector<1x128xf32> to vector<8x128xf32>
    %85 = arith.addf %83, %84 : vector<8x128xf32>
    %cst_46 = arith.constant 0.000000e+00 : f32
    %86 = vector.broadcast %cst_46 : f32 to vector<8x128xf32>
    %87 = arith.maximumf %85, %86 : vector<8x128xf32>
    %88 = arith.truncf %87 : vector<8x128xf32> to vector<8x128xbf16>
    %c0_47 = arith.constant 0 : index
    %c0_48 = arith.constant 0 : index
    %89 = vector.load %arg7[%c0_47, %c0_48] : memref<128x32xbf16, #tpu.memory_space<vmem>>, vector<128x32xbf16>
    %cst_49 = arith.constant dense<0.000000e+00> : vector<8x32xf32>
    %90 = tpu.matmul %88, %89, %cst_49 {dimension_numbers = #tpu.dot_dimension_numbers<[1], [0], [0], [1], [0, 0, 1, 1], [], []>} : vector<8x128xbf16>, vector<128x32xbf16>, vector<8x32xf32> -> vector<8x32xf32>
    %91 = vector.broadcast %7 : vector<1x32xf32> to vector<8x32xf32>
    %92 = arith.addf %90, %91 : vector<8x32xf32>
    %93 = arith.addf %80, %92 : vector<8x32xf32>
    %cst_50 = arith.constant dense<0.000000e+00> : vector<8xf32>
    %94 = vector.multi_reduction <add>, %93, %cst_50 [1] : vector<8x32xf32> to vector<8xf32>
    %95 = vector.shape_cast %94 : vector<8xf32> to vector<8x1xf32>
    %cst_51 = arith.constant 3.200000e+01 : f32
    %96 = vector.broadcast %cst_51 : f32 to vector<8x1xf32>
    %97 = arith.divf %95, %96 : vector<8x1xf32>
    %98 = vector.broadcast %97 : vector<8x1xf32> to vector<8x32xf32>
    %99 = arith.subf %93, %98 : vector<8x32xf32>
    %100 = vector.broadcast %97 : vector<8x1xf32> to vector<8x32xf32>
    %101 = arith.subf %93, %100 : vector<8x32xf32>
    %102 = arith.mulf %99, %101 : vector<8x32xf32>
    %cst_52 = arith.constant dense<0.000000e+00> : vector<8xf32>
    %103 = vector.multi_reduction <add>, %102, %cst_52 [1] : vector<8x32xf32> to vector<8xf32>
    %104 = vector.shape_cast %103 : vector<8xf32> to vector<8x1xf32>
    %cst_53 = arith.constant 3.200000e+01 : f32
    %105 = vector.broadcast %cst_53 : f32 to vector<8x1xf32>
    %106 = arith.divf %104, %105 : vector<8x1xf32>
    %cst_54 = arith.constant 9.99999974E-6 : f32
    %107 = vector.broadcast %cst_54 : f32 to vector<8x1xf32>
    %108 = arith.addf %106, %107 : vector<8x1xf32>
    %109 = math.rsqrt %108 : vector<8x1xf32>
    %110 = vector.broadcast %97 : vector<8x1xf32> to vector<8x32xf32>
    %111 = arith.subf %93, %110 : vector<8x32xf32>
    %112 = vector.broadcast %109 : vector<8x1xf32> to vector<8x32xf32>
    %113 = arith.mulf %111, %112 : vector<8x32xf32>
    %114 = vector.broadcast %10 : vector<1x32xf32> to vector<8x32xf32>
    %115 = arith.mulf %113, %114 : vector<8x32xf32>
    %116 = vector.broadcast %11 : vector<1x32xf32> to vector<8x32xf32>
    %117 = arith.addf %115, %116 : vector<8x32xf32>
    %c0_55 = arith.constant 0 : index
    %c0_56 = arith.constant 0 : index
    %c0_57 = arith.constant 0 : index
    %118 = vector.load %arg18[%c0_55, %c0_56, %c0_57] : memref<1x8x32xf32, #tpu.memory_space<vmem>>, vector<1x8x32xf32>
    %119 = vector.shape_cast %118 : vector<1x8x32xf32> to vector<8x32xf32>
    %120 = vector.shape_cast %117 : vector<8x32xf32> to vector<1x8x32xf32>
    tpu.vector_store %arg18[%c0_55, %c0_56, %c0_57], %120 {strides = array<i32>} : memref<1x8x32xf32, #tpu.memory_space<vmem>>, vector<1x8x32xf32>,
    return
  }
  func.func @transform_0(%arg0: i32) -> (i32, i32, i32) {
    %c0_i32 = arith.constant 0 : i32
    %c0_i32_0 = arith.constant 0 : i32
    %c0_i32_1 = arith.constant 0 : i32
    return %arg0, %c0_i32, %c0_i32_0 : i32, i32, i32
  }
  func.func @transform_1(%arg0: i32) -> (i32, i32) {
    %c0_i32 = arith.constant 0 : i32
    %c0_i32_0 = arith.constant 0 : i32
    %c0_i32_1 = arith.constant 0 : i32
    return %c0_i32, %c0_i32_0 : i32, i32
  }
  func.func @transform_2(%arg0: i32) -> (i32, i32) {
    %c0_i32 = arith.constant 0 : i32
    %c0_i32_0 = arith.constant 0 : i32
    %c0_i32_1 = arith.constant 0 : i32
    return %c0_i32, %c0_i32_0 : i32, i32
  }
  func.func @transform_3(%arg0: i32) -> (i32, i32) {
    %c0_i32 = arith.constant 0 : i32
    %c0_i32_0 = arith.constant 0 : i32
    %c0_i32_1 = arith.constant 0 : i32
    return %c0_i32, %c0_i32_0 : i32, i32
  }
  func.func @transform_4(%arg0: i32) -> (i32, i32) {
    %c0_i32 = arith.constant 0 : i32
    %c0_i32_0 = arith.constant 0 : i32
    %c0_i32_1 = arith.constant 0 : i32
    return %c0_i32, %c0_i32_0 : i32, i32
  }
  func.func @transform_5(%arg0: i32) -> (i32, i32) {
    %c0_i32 = arith.constant 0 : i32
    %c0_i32_0 = arith.constant 0 : i32
    %c0_i32_1 = arith.constant 0 : i32
    return %c0_i32, %c0_i32_0 : i32, i32
  }
  func.func @transform_6(%arg0: i32) -> (i32, i32) {
    %c0_i32 = arith.constant 0 : i32
    %c0_i32_0 = arith.constant 0 : i32
    %c0_i32_1 = arith.constant 0 : i32
    return %c0_i32, %c0_i32_0 : i32, i32
  }
  func.func @transform_7(%arg0: i32) -> (i32, i32) {
    %c0_i32 = arith.constant 0 : i32
    %c0_i32_0 = arith.constant 0 : i32
    %c0_i32_1 = arith.constant 0 : i32
    return %c0_i32, %c0_i32_0 : i32, i32
  }
  func.func @transform_8(%arg0: i32) -> (i32, i32) {
    %c0_i32 = arith.constant 0 : i32
    %c0_i32_0 = arith.constant 0 : i32
    %c0_i32_1 = arith.constant 0 : i32
    return %c0_i32, %c0_i32_0 : i32, i32
  }
  func.func @transform_9(%arg0: i32) -> (i32, i32) {
    %c0_i32 = arith.constant 0 : i32
    %c0_i32_0 = arith.constant 0 : i32
    %c0_i32_1 = arith.constant 0 : i32
    return %c0_i32, %c0_i32_0 : i32, i32
  }
  func.func @transform_10(%arg0: i32) -> (i32, i32) {
    %c0_i32 = arith.constant 0 : i32
    %c0_i32_0 = arith.constant 0 : i32
    %c0_i32_1 = arith.constant 0 : i32
    return %c0_i32, %c0_i32_0 : i32, i32
  }
  func.func @transform_11(%arg0: i32) -> (i32, i32) {
    %c0_i32 = arith.constant 0 : i32
    %c0_i32_0 = arith.constant 0 : i32
    %c0_i32_1 = arith.constant 0 : i32
    return %c0_i32, %c0_i32_0 : i32, i32
  }
  func.func @transform_12(%arg0: i32) -> (i32, i32) {
    %c0_i32 = arith.constant 0 : i32
    %c0_i32_0 = arith.constant 0 : i32
    %c0_i32_1 = arith.constant 0 : i32
    return %c0_i32, %c0_i32_0 : i32, i32
  }
  func.func @transform_13(%arg0: i32) -> (i32, i32) {
    %c0_i32 = arith.constant 0 : i32
    %c0_i32_0 = arith.constant 0 : i32
    %c0_i32_1 = arith.constant 0 : i32
    return %c0_i32, %c0_i32_0 : i32, i32
  }
  func.func @transform_14(%arg0: i32) -> (i32, i32) {
    %c0_i32 = arith.constant 0 : i32
    %c0_i32_0 = arith.constant 0 : i32
    %c0_i32_1 = arith.constant 0 : i32
    return %c0_i32, %c0_i32_0 : i32, i32
  }
  func.func @transform_15(%arg0: i32) -> (i32, i32) {
    %c0_i32 = arith.constant 0 : i32
    %c0_i32_0 = arith.constant 0 : i32
    %c0_i32_1 = arith.constant 0 : i32
    return %c0_i32, %c0_i32_0 : i32, i32
  }
  func.func @transform_16(%arg0: i32) -> (i32, i32) {
    %c0_i32 = arith.constant 0 : i32
    %c0_i32_0 = arith.constant 0 : i32
    %c0_i32_1 = arith.constant 0 : i32
    return %c0_i32, %c0_i32_0 : i32, i32
  }
  func.func @transform_17(%arg0: i32) -> (i32, i32, i32) {
    %c0_i32 = arith.constant 0 : i32
    %c0_i32_0 = arith.constant 0 : i32
    %c0_i32_1 = arith.constant 0 : i32
    return %arg0, %c0_i32, %c0_i32_0 : i32, i32, i32
  }
}

</mosaic_0001>

<llo_original>
// kernel: tpu_custom_call.1
$region0: #{tpu_custom_call.1}
  #allocation0 [shape = 'u32[]', space=smem, size = 0x4, offset = 0x4, fixed_abs, tag = 'smem constant byte address 0x4 - core index']
  #allocation1 [shape = 'u32[144,128]{1,0:T(1,128)}', space=vmem, size = 0x12000, scoped, tag = 'internal scratch']
  %s0 = inlined_call_operand.vmem [shape: f32[2,8,32], index: 0, kind: input, shape index: {}]
  %s1 = inlined_call_operand.vmem [shape: bf16[32,32], index: 1, kind: input, shape index: {}]
  %s2 = inlined_call_operand.vmem [shape: bf16[32,32], index: 2, kind: input, shape index: {}]
  %s3 = inlined_call_operand.vmem [shape: bf16[32,32], index: 3, kind: input, shape index: {}]
  %s4 = inlined_call_operand.vmem [shape: bf16[32,32], index: 4, kind: input, shape index: {}]
  %s5 = inlined_call_operand.hbm [shape: bf16[32,128], index: 5, kind: input, shape index: {}]
  %s6 = inlined_call_operand.vmem [shape: bf16[128,32], index: 6, kind: input, shape index: {}]
  %s7 = inlined_call_operand.vmem [shape: f32[1,32], index: 7, kind: input, shape index: {}]
  %s8 = inlined_call_operand.vmem [shape: f32[1,32], index: 8, kind: input, shape index: {}]
  %s9 = inlined_call_operand.vmem [shape: f32[1,32], index: 9, kind: input, shape index: {}]
  %s10 = inlined_call_operand.vmem [shape: f32[1,32], index: 10, kind: input, shape index: {}]
  %s11 = inlined_call_operand.vmem [shape: f32[1,128], index: 11, kind: input, shape index: {}]
  %s12 = inlined_call_operand.vmem [shape: f32[1,32], index: 12, kind: input, shape index: {}]
  %s13 = inlined_call_operand.vmem [shape: f32[1,32], index: 13, kind: input, shape index: {}]
  %s14 = inlined_call_operand.vmem [shape: f32[1,32], index: 14, kind: input, shape index: {}]
  %s15 = inlined_call_operand.vmem [shape: f32[1,32], index: 15, kind: input, shape index: {}]
  %s16 = inlined_call_operand.vmem [shape: f32[1,32], index: 16, kind: input, shape index: {}]
  %s17 = inlined_call_operand.hbm [shape: f32[2,8,32], index: 17, kind: output, shape index: {}]
  %s18 = sld [smem:[#allocation0]]
  $region105: #{tpu_custom_call.1} parent=0
    _
  %s20 = ssub.s32 1, %s18
  %s21 = scalar_select 0, %s20, %s18
  $region1: #{tpu_custom_call.1} parent=0
    #allocation2 [shape = 'u8[8192]{0}', space=vmem, size = 0x2000, scoped, tag = 'input window, operand 5, single buffered']
    #allocation3 [shape = 's32[2]{0}', space=sflag, size = 0x8, scoped, tag = 'scoped memory for tpu_custom_call.1']
    #allocation4 [shape = 's32[2]{0}', space=sflag, size = 0x8, scoped, tag = 'scoped memory for tpu_custom_call.1']
    #allocation5 [shape = 'u8[8192]{0}', space=vmem, size = 0x2000, scoped, tag = 'output window, operand 0']
    %22 = vsyncpa [#allocation3], 0
    %23 = vsyncpa [#allocation4], 0
    %s24 = scalar_lea.sflag [#allocation4], 1
    %25 = vsyncpa %s24, 0
    loop: start=0, step=1, limit=4
    $region2: #{tpu_custom_call.1} parent=1 // loop_pre_header
      _
    $region3: #{tpu_custom_call.1} parent=1 // loop_header
      %s27 = sphi 0, %s31
      %p28 = scmp.ge.s32.totalorder %s27, 4
      %s37 = sphi 0, %s39
      %s40 = sphi 0, %s37
      %s41 = sphi 0, %s40
      %s57 = sphi 0, %s41
      %s61 = sphi 0, %s61
      %s63 = sphi 0, %s61
      %s64 = sphi 0, %s63
      %s78 = sphi 0, %s64
      %s82 = sphi 0, %s82
      %s84 = sphi 0, %s82
      %s85 = sphi 0, %s84
      %s99 = sphi 0, %s85
      %s103 = sphi 0, %s103
      %s105 = sphi 0, %s103
      %s106 = sphi 0, %s105
      %s120 = sphi 0, %s106
      %s124 = sphi 0, %s124
      %s126 = sphi 0, %s124
      %s127 = sphi 0, %s126
      %s141 = sphi 0, %s127
      %s145 = sphi 0, %s145
      %s147 = sphi 0, %s145
      %s148 = sphi 0, %s147
      %s162 = sphi 0, %s148
      %s166 = sphi 0, %s166
      %s168 = sphi 0, %s166
      %s169 = sphi 0, %s168
      %s183 = sphi 0, %s169
      %s187 = sphi 0, %s187
      %s189 = sphi 0, %s187
      %s190 = sphi 0, %s189
      %s204 = sphi 0, %s190
      %s208 = sphi 0, %s208
      %s210 = sphi 0, %s208
      %s211 = sphi 0, %s210
      %s225 = sphi 0, %s211
      %s229 = sphi 0, %s229
      %s231 = sphi 0, %s229
      %s232 = sphi 0, %s231
      %s246 = sphi 0, %s232
      %s250 = sphi 0, %s250
      %s252 = sphi 0, %s250
      %s253 = sphi 0, %s252
      %s267 = sphi 0, %s253
      %s271 = sphi 0, %s271
      %s273 = sphi 0, %s271
      %s274 = sphi 0, %s273
      %s288 = sphi 0, %s274
      %s292 = sphi 0, %s292
      %s294 = sphi 0, %s292
      %s295 = sphi 0, %s294
      %s309 = sphi 0, %s295
      %s313 = sphi 0, %s313
      %s315 = sphi 0, %s313
      %s316 = sphi 0, %s315
      %s330 = sphi 0, %s316
      %s334 = sphi 0, %s334
      %s336 = sphi 0, %s334
      %s337 = sphi 0, %s336
      %s351 = sphi 0, %s337
      %s355 = sphi 0, %s355
      %s357 = sphi 0, %s355
      %s358 = sphi 0, %s357
      %s372 = sphi 0, %s358
      %s376 = sphi 0, %s376
      %s378 = sphi 0, %s376
      %s379 = sphi 0, %s378
      %s393 = sphi 0, %s379
      %s399 = sphi 0, %s401
      %s402 = sphi 0, %s399
      %s403 = sphi 0, %s402
      %s419 = sphi 0, %s403
    $region4: #{tpu_custom_call.1} parent=1 // loop_header_branch
      %30 = sbr.rel (%p28) target = $region8
    $region5: #{tpu_custom_call.1} parent=1 // loop_body
      %s32 = ssub.s32 %s27, 1
      %s33 = ssub.s32 %s27, 2
      %s34 = sadd.s32 %s27, 1
      %s35 = ssub.s32 %s27, %s34
      %p36 = scmp.eq.s32.totalorder %s35, 0
      %s38 = sadd.s32 %s37, 1
      %s39 = scalar_select %p36, %s37, %s38
      %p42 = pneg %p36
      %p43 = scmp.eq.s32.totalorder %s27, 1
      %p44 = por %p42, %p43
      %p45 = scmp.ne.s32.totalorder %s37, %s40
      %p46 = scmp.eq.s32.totalorder %s27, 0
      %p47 = por %p45, %p46
      %p48 = scmp.ne.s32.totalorder %s37, %s40
      %p49 = scmp.eq.s32.totalorder %s32, 1
      %p50 = por %p48, %p49
      %p51 = scmp.ne.s32.totalorder %s40, %s41
      %p52 = scmp.eq.s32.totalorder %s32, 0
      %p53 = por %p51, %p52
      %p54 = scmp.ne.s32.totalorder %s40, %s41
      %p55 = scmp.eq.s32.totalorder %s33, 1
      %p56 = por %p54, %p55
      %p58 = scmp.ne.s32.totalorder %s41, %s57
      %p59 = scmp.eq.s32.totalorder %s33, 0
      %p60 = por %p58, %p59
      %s62 = sadd.s32 %s61, 1
      %p65 = scmp.eq.s32.totalorder %s27, 1
      %p66 = scmp.ne.s32.totalorder %s61, %s63
      %p67 = scmp.eq.s32.totalorder %s27, 0
      %p68 = por %p66, %p67
      %p69 = scmp.ne.s32.totalorder %s61, %s63
      %p70 = scmp.eq.s32.totalorder %s32, 1
      %p71 = por %p69, %p70
      %p72 = scmp.ne.s32.totalorder %s63, %s64
      %p73 = scmp.eq.s32.totalorder %s32, 0
      %p74 = por %p72, %p73
      %p75 = scmp.ne.s32.totalorder %s63, %s64
      %p76 = scmp.eq.s32.totalorder %s33, 1
      %p77 = por %p75, %p76
      %p79 = scmp.ne.s32.totalorder %s64, %s78
      %p80 = scmp.eq.s32.totalorder %s33, 0
      %p81 = por %p79, %p80
      %s83 = sadd.s32 %s82, 1
      %p86 = scmp.eq.s32.totalorder %s27, 1
      %p87 = scmp.ne.s32.totalorder %s82, %s84
      %p88 = scmp.eq.s32.totalorder %s27, 0
      %p89 = por %p87, %p88
      %p90 = scmp.ne.s32.totalorder %s82, %s84
      %p91 = scmp.eq.s32.totalorder %s32, 1
      %p92 = por %p90, %p91
      %p93 = scmp.ne.s32.totalorder %s84, %s85
      %p94 = scmp.eq.s32.totalorder %s32, 0
      %p95 = por %p93, %p94
      %p96 = scmp.ne.s32.totalorder %s84, %s85
      %p97 = scmp.eq.s32.totalorder %s33, 1
      %p98 = por %p96, %p97
      %p100 = scmp.ne.s32.totalorder %s85, %s99
      %p101 = scmp.eq.s32.totalorder %s33, 0
      %p102 = por %p100, %p101
      %s104 = sadd.s32 %s103, 1
      %p107 = scmp.eq.s32.totalorder %s27, 1
      %p108 = scmp.ne.s32.totalorder %s103, %s105
      %p109 = scmp.eq.s32.totalorder %s27, 0
      %p110 = por %p108, %p109
      %p111 = scmp.ne.s32.totalorder %s103, %s105
      %p112 = scmp.eq.s32.totalorder %s32, 1
      %p113 = por %p111, %p112
      %p114 = scmp.ne.s32.totalorder %s105, %s106
      %p115 = scmp.eq.s32.totalorder %s32, 0
      %p116 = por %p114, %p115
      %p117 = scmp.ne.s32.totalorder %s105, %s106
      %p118 = scmp.eq.s32.totalorder %s33, 1
      %p119 = por %p117, %p118
      %p121 = scmp.ne.s32.totalorder %s106, %s120
      %p122 = scmp.eq.s32.totalorder %s33, 0
      %p123 = por %p121, %p122
      %s125 = sadd.s32 %s124, 1
      %p128 = scmp.eq.s32.totalorder %s27, 1
      %p129 = scmp.ne.s32.totalorder %s124, %s126
      %p130 = scmp.eq.s32.totalorder %s27, 0
      %p131 = por %p129, %p130
      %p132 = scmp.ne.s32.totalorder %s124, %s126
      %p133 = scmp.eq.s32.totalorder %s32, 1
      %p134 = por %p132, %p133
      %p135 = scmp.ne.s32.totalorder %s126, %s127
      %p136 = scmp.eq.s32.totalorder %s32, 0
      %p137 = por %p135, %p136
      %p138 = scmp.ne.s32.totalorder %s126, %s127
      %p139 = scmp.eq.s32.totalorder %s33, 1
      %p140 = por %p138, %p139
      %p142 = scmp.ne.s32.totalorder %s127, %s141
      %p143 = scmp.eq.s32.totalorder %s33, 0
      %p144 = por %p142, %p143
      %s146 = sadd.s32 %s145, 1
      %p149 = scmp.eq.s32.totalorder %s27, 1
      %p150 = scmp.ne.s32.totalorder %s145, %s147
      %p151 = scmp.eq.s32.totalorder %s27, 0
      %p152 = por %p150, %p151
      %p153 = scmp.ne.s32.totalorder %s145, %s147
      %p154 = scmp.eq.s32.totalorder %s32, 1
      %p155 = por %p153, %p154
      %p156 = scmp.ne.s32.totalorder %s147, %s148
      %p157 = scmp.eq.s32.totalorder %s32, 0
      %p158 = por %p156, %p157
      %p159 = scmp.ne.s32.totalorder %s147, %s148
      %p160 = scmp.eq.s32.totalorder %s33, 1
      %p161 = por %p159, %p160
      %p163 = scmp.ne.s32.totalorder %s148, %s162
      %p164 = scmp.eq.s32.totalorder %s33, 0
      %p165 = por %p163, %p164
      %s167 = sadd.s32 %s166, 1
      %p170 = scmp.eq.s32.totalorder %s27, 1
      %p171 = scmp.ne.s32.totalorder %s166, %s168
      %p172 = scmp.eq.s32.totalorder %s27, 0
      %p173 = por %p171, %p172
      %p174 = scmp.ne.s32.totalorder %s166, %s168
      %p175 = scmp.eq.s32.totalorder %s32, 1
      %p176 = por %p174, %p175
      %p177 = scmp.ne.s32.totalorder %s168, %s169
      %p178 = scmp.eq.s32.totalorder %s32, 0
      %p179 = por %p177, %p178
      %p180 = scmp.ne.s32.totalorder %s168, %s169
      %p181 = scmp.eq.s32.totalorder %s33, 1
      %p182 = por %p180, %p181
      %p184 = scmp.ne.s32.totalorder %s169, %s183
      %p185 = scmp.eq.s32.totalorder %s33, 0
      %p186 = por %p184, %p185
      %s188 = sadd.s32 %s187, 1
      %p191 = scmp.eq.s32.totalorder %s27, 1
      %p192 = scmp.ne.s32.totalorder %s187, %s189
      %p193 = scmp.eq.s32.totalorder %s27, 0
      %p194 = por %p192, %p193
      %p195 = scmp.ne.s32.totalorder %s187, %s189
      %p196 = scmp.eq.s32.totalorder %s32, 1
      %p197 = por %p195, %p196
      %p198 = scmp.ne.s32.totalorder %s189, %s190
      %p199 = scmp.eq.s32.totalorder %s32, 0
      %p200 = por %p198, %p199
      %p201 = scmp.ne.s32.totalorder %s189, %s190
      %p202 = scmp.eq.s32.totalorder %s33, 1
      %p203 = por %p201, %p202
      %p205 = scmp.ne.s32.totalorder %s190, %s204
      %p206 = scmp.eq.s32.totalorder %s33, 0
      %p207 = por %p205, %p206
      %s209 = sadd.s32 %s208, 1
      %p212 = scmp.eq.s32.totalorder %s27, 1
      %p213 = scmp.ne.s32.totalorder %s208, %s210
      %p214 = scmp.eq.s32.totalorder %s27, 0
      %p215 = por %p213, %p214
      %p216 = scmp.ne.s32.totalorder %s208, %s210
      %p217 = scmp.eq.s32.totalorder %s32, 1
      %p218 = por %p216, %p217
      %p219 = scmp.ne.s32.totalorder %s210, %s211
      %p220 = scmp.eq.s32.totalorder %s32, 0
      %p221 = por %p219, %p220
      %p222 = scmp.ne.s32.totalorder %s210, %s211
      %p223 = scmp.eq.s32.totalorder %s33, 1
      %p224 = por %p222, %p223
      %p226 = scmp.ne.s32.totalorder %s211, %s225
      %p227 = scmp.eq.s32.totalorder %s33, 0
      %p228 = por %p226, %p227
      %s230 = sadd.s32 %s229, 1
      %p233 = scmp.eq.s32.totalorder %s27, 1
      %p234 = scmp.ne.s32.totalorder %s229, %s231
      %p235 = scmp.eq.s32.totalorder %s27, 0
      %p236 = por %p234, %p235
      %p237 = scmp.ne.s32.totalorder %s229, %s231
      %p238 = scmp.eq.s32.totalorder %s32, 1
      %p239 = por %p237, %p238
      %p240 = scmp.ne.s32.totalorder %s231, %s232
      %p241 = scmp.eq.s32.totalorder %s32, 0
      %p242 = por %p240, %p241
      %p243 = scmp.ne.s32.totalorder %s231, %s232
      %p244 = scmp.eq.s32.totalorder %s33, 1
      %p245 = por %p243, %p244
      %p247 = scmp.ne.s32.totalorder %s232, %s246
      %p248 = scmp.eq.s32.totalorder %s33, 0
      %p249 = por %p247, %p248
      %s251 = sadd.s32 %s250, 1
      %p254 = scmp.eq.s32.totalorder %s27, 1
      %p255 = scmp.ne.s32.totalorder %s250, %s252
      %p256 = scmp.eq.s32.totalorder %s27, 0
      %p257 = por %p255, %p256
      %p258 = scmp.ne.s32.totalorder %s250, %s252
      %p259 = scmp.eq.s32.totalorder %s32, 1
      %p260 = por %p258, %p259
      %p261 = scmp.ne.s32.totalorder %s252, %s253
      %p262 = scmp.eq.s32.totalorder %s32, 0
      %p263 = por %p261, %p262
      %p264 = scmp.ne.s32.totalorder %s252, %s253
      %p265 = scmp.eq.s32.totalorder %s33, 1
      %p266 = por %p264, %p265
      %p268 = scmp.ne.s32.totalorder %s253, %s267
      %p269 = scmp.eq.s32.totalorder %s33, 0
      %p270 = por %p268, %p269
      %s272 = sadd.s32 %s271, 1
      %p275 = scmp.eq.s32.totalorder %s27, 1
      %p276 = scmp.ne.s32.totalorder %s271, %s273
      %p277 = scmp.eq.s32.totalorder %s27, 0
      %p278 = por %p276, %p277
      %p279 = scmp.ne.s32.totalorder %s271, %s273
      %p280 = scmp.eq.s32.totalorder %s32, 1
      %p281 = por %p279, %p280
      %p282 = scmp.ne.s32.totalorder %s273, %s274
      %p283 = scmp.eq.s32.totalorder %s32, 0
      %p284 = por %p282, %p283
      %p285 = scmp.ne.s32.totalorder %s273, %s274
      %p286 = scmp.eq.s32.totalorder %s33, 1
      %p287 = por %p285, %p286
      %p289 = scmp.ne.s32.totalorder %s274, %s288
      %p290 = scmp.eq.s32.totalorder %s33, 0
      %p291 = por %p289, %p290
      %s293 = sadd.s32 %s292, 1
      %p296 = scmp.eq.s32.totalorder %s27, 1
      %p297 = scmp.ne.s32.totalorder %s292, %s294
      %p298 = scmp.eq.s32.totalorder %s27, 0
      %p299 = por %p297, %p298
      %p300 = scmp.ne.s32.totalorder %s292, %s294
      %p301 = scmp.eq.s32.totalorder %s32, 1
      %p302 = por %p300, %p301
      %p303 = scmp.ne.s32.totalorder %s294, %s295
      %p304 = scmp.eq.s32.totalorder %s32, 0
      %p305 = por %p303, %p304
      %p306 = scmp.ne.s32.totalorder %s294, %s295
      %p307 = scmp.eq.s32.totalorder %s33, 1
      %p308 = por %p306, %p307
      %p310 = scmp.ne.s32.totalorder %s295, %s309
      %p311 = scmp.eq.s32.totalorder %s33, 0
      %p312 = por %p310, %p311
      %s314 = sadd.s32 %s313, 1
      %p317 = scmp.eq.s32.totalorder %s27, 1
      %p318 = scmp.ne.s32.totalorder %s313, %s315
      %p319 = scmp.eq.s32.totalorder %s27, 0
      %p320 = por %p318, %p319
      %p321 = scmp.ne.s32.totalorder %s313, %s315
      %p322 = scmp.eq.s32.totalorder %s32, 1
      %p323 = por %p321, %p322
      %p324 = scmp.ne.s32.totalorder %s315, %s316
      %p325 = scmp.eq.s32.totalorder %s32, 0
      %p326 = por %p324, %p325
      %p327 = scmp.ne.s32.totalorder %s315, %s316
      %p328 = scmp.eq.s32.totalorder %s33, 1
      %p329 = por %p327, %p328
      %p331 = scmp.ne.s32.totalorder %s316, %s330
      %p332 = scmp.eq.s32.totalorder %s33, 0
      %p333 = por %p331, %p332
      %s335 = sadd.s32 %s334, 1
      %p338 = scmp.eq.s32.totalorder %s27, 1
      %p339 = scmp.ne.s32.totalorder %s334, %s336
      %p340 = scmp.eq.s32.totalorder %s27, 0
      %p341 = por %p339, %p340
      %p342 = scmp.ne.s32.totalorder %s334, %s336
      %p343 = scmp.eq.s32.totalorder %s32, 1
      %p344 = por %p342, %p343
      %p345 = scmp.ne.s32.totalorder %s336, %s337
      %p346 = scmp.eq.s32.totalorder %s32, 0
      %p347 = por %p345, %p346
      %p348 = scmp.ne.s32.totalorder %s336, %s337
      %p349 = scmp.eq.s32.totalorder %s33, 1
      %p350 = por %p348, %p349
      %p352 = scmp.ne.s32.totalorder %s337, %s351
      %p353 = scmp.eq.s32.totalorder %s33, 0
      %p354 = por %p352, %p353
      %s356 = sadd.s32 %s355, 1
      %p359 = scmp.eq.s32.totalorder %s27, 1
      %p360 = scmp.ne.s32.totalorder %s355, %s357
      %p361 = scmp.eq.s32.totalorder %s27, 0
      %p362 = por %p360, %p361
      %p363 = scmp.ne.s32.totalorder %s355, %s357
      %p364 = scmp.eq.s32.totalorder %s32, 1
      %p365 = por %p363, %p364
      %p366 = scmp.ne.s32.totalorder %s357, %s358
      %p367 = scmp.eq.s32.totalorder %s32, 0
      %p368 = por %p366, %p367
      %p369 = scmp.ne.s32.totalorder %s357, %s358
      %p370 = scmp.eq.s32.totalorder %s33, 1
      %p371 = por %p369, %p370
      %p373 = scmp.ne.s32.totalorder %s358, %s372
      %p374 = scmp.eq.s32.totalorder %s33, 0
      %p375 = por %p373, %p374
      %s377 = sadd.s32 %s376, 1
      %p380 = scmp.eq.s32.totalorder %s27, 1
      %p381 = scmp.ne.s32.totalorder %s376, %s378
      %p382 = scmp.eq.s32.totalorder %s27, 0
      %p383 = por %p381, %p382
      %p384 = scmp.ne.s32.totalorder %s376, %s378
      %p385 = scmp.eq.s32.totalorder %s32, 1
      %p386 = por %p384, %p385
      %p387 = scmp.ne.s32.totalorder %s378, %s379
      %p388 = scmp.eq.s32.totalorder %s32, 0
      %p389 = por %p387, %p388
      %p390 = scmp.ne.s32.totalorder %s378, %s379
      %p391 = scmp.eq.s32.totalorder %s33, 1
      %p392 = por %p390, %p391
      %p394 = scmp.ne.s32.totalorder %s379, %s393
      %p395 = scmp.eq.s32.totalorder %s33, 0
      %p396 = por %p394, %p395
      %s397 = ssub.s32 %s27, %s34
      %p398 = scmp.eq.s32.totalorder %s397, 0
      %s400 = sadd.s32 %s399, 1
      %s401 = scalar_select %p398, %s399, %s400
      %p404 = pneg %p398
      %p405 = scmp.eq.s32.totalorder %s27, 1
      %p406 = por %p404, %p405
      %p407 = scmp.ne.s32.totalorder %s399, %s402
      %p408 = scmp.eq.s32.totalorder %s27, 0
      %p409 = por %p407, %p408
      %p410 = scmp.ne.s32.totalorder %s399, %s402
      %p411 = scmp.eq.s32.totalorder %s32, 1
      %p412 = por %p410, %p411
      %p413 = scmp.ne.s32.totalorder %s402, %s403
      %p414 = scmp.eq.s32.totalorder %s32, 0
      %p415 = por %p413, %p414
      %p416 = scmp.ne.s32.totalorder %s402, %s403
      %p417 = scmp.eq.s32.totalorder %s33, 1
      %p418 = por %p416, %p417
      %p420 = scmp.ne.s32.totalorder %s403, %s419
      %p421 = scmp.eq.s32.totalorder %s33, 0
      %p422 = por %p420, %p421
      %p423 = scmp.le.s32.totalorder 1, %s27
      %p424 = scmp.lt.s32.totalorder %s27, 3
      %p425 = pnand %p423, %p424
      %p426 = pneg %p425
      // Predicated region
      $region9: #{tpu_custom_call.1} parent=5 // pred_check
        _
      $region10: #{tpu_custom_call.1} parent=5 // pred_check_branch
        %428 = sbr.rel (%p425) target = $region12
      $region11: #{tpu_custom_call.1} parent=5 // pred_region
        %s429 = ssub.s32 %s27, 1
        // Predicated region
        $region13: #{tpu_custom_call.1} parent=11 // pred_check
          %p430 = pneg %p74
        $region14: #{tpu_custom_call.1} parent=11 // pred_check_branch
          %432 = sbr.rel (%p430) target = $region16
        $region15: #{tpu_custom_call.1} parent=11 // pred_region
          _
        $region16: #{tpu_custom_call.1} parent=11 // pred_fallthru
          _
        // Predicated region
        $region17: #{tpu_custom_call.1} parent=11 // pred_check
          %p433 = pneg %p95
        $region18: #{tpu_custom_call.1} parent=11 // pred_check_branch
          %435 = sbr.rel (%p433) target = $region20
        $region19: #{tpu_custom_call.1} parent=11 // pred_region
          _
        $region20: #{tpu_custom_call.1} parent=11 // pred_fallthru
          _
        // Predicated region
        $region21: #{tpu_custom_call.1} parent=11 // pred_check
          %p436 = pneg %p116
        $region22: #{tpu_custom_call.1} parent=11 // pred_check_branch
          %438 = sbr.rel (%p436) target = $region24
        $region23: #{tpu_custom_call.1} parent=11 // pred_region
          _
        $region24: #{tpu_custom_call.1} parent=11 // pred_fallthru
          _
        // Predicated region
        $region25: #{tpu_custom_call.1} parent=11 // pred_check
          %p439 = pneg %p137
        $region26: #{tpu_custom_call.1} parent=11 // pred_check_branch
          %441 = sbr.rel (%p439) target = $region28
        $region27: #{tpu_custom_call.1} parent=11 // pred_region
          _
        $region28: #{tpu_custom_call.1} parent=11 // pred_fallthru
          _
        // Predicated region
        $region29: #{tpu_custom_call.1} parent=11 // pred_check
          %p442 = pneg %p158
        $region30: #{tpu_custom_call.1} parent=11 // pred_check_branch
          %444 = sbr.rel (%p442) target = $region32
        $region31: #{tpu_custom_call.1} parent=11 // pred_region
          %s446 = ssub.s32 256, 256
          %447 = vsyncadd [#allocation3], %s446
          %s448 = sshll.u32 [#allocation2], 4
          %s449 = int_to_ptr.vmem [resolvable:$true] %s448
          %454 = dma.hbm_to_vmem [thread:$0]  %s5, 256, %s449, [#allocation3], 64, 64, 4
        $region32: #{tpu_custom_call.1} parent=11 // pred_fallthru
          _
        // Predicated region
        $region33: #{tpu_custom_call.1} parent=11 // pred_check
          %p455 = pneg %p179
        $region34: #{tpu_custom_call.1} parent=11 // pred_check_branch
          %457 = sbr.rel (%p455) target = $region36
        $region35: #{tpu_custom_call.1} parent=11 // pred_region
          _
        $region36: #{tpu_custom_call.1} parent=11 // pred_fallthru
          _
        // Predicated region
        $region37: #{tpu_custom_call.1} parent=11 // pred_check
          %p458 = pneg %p200
        $region38: #{tpu_custom_call.1} parent=11 // pred_check_branch
          %460 = sbr.rel (%p458) target = $region40
        $region39: #{tpu_custom_call.1} parent=11 // pred_region
          _
        $region40: #{tpu_custom_call.1} parent=11 // pred_fallthru
          _
        // Predicated region
        $region41: #{tpu_custom_call.1} parent=11 // pred_check
          %p461 = pneg %p221
        $region42: #{tpu_custom_call.1} parent=11 // pred_check_branch
          %463 = sbr.rel (%p461) target = $region44
        $region43: #{tpu_custom_call.1} parent=11 // pred_region
          _
        $region44: #{tpu_custom_call.1} parent=11 // pred_fallthru
          _
        // Predicated region
        $region45: #{tpu_custom_call.1} parent=11 // pred_check
          %p464 = pneg %p242
        $region46: #{tpu_custom_call.1} parent=11 // pred_check_branch
          %466 = sbr.rel (%p464) target = $region48
        $region47: #{tpu_custom_call.1} parent=11 // pred_region
          _
        $region48: #{tpu_custom_call.1} parent=11 // pred_fallthru
          _
        // Predicated region
        $region49: #{tpu_custom_call.1} parent=11 // pred_check
          %p467 = pneg %p263
        $region50: #{tpu_custom_call.1} parent=11 // pred_check_branch
          %469 = sbr.rel (%p467) target = $region52
        $region51: #{tpu_custom_call.1} parent=11 // pred_region
          _
        $region52: #{tpu_custom_call.1} parent=11 // pred_fallthru
          _
        // Predicated region
        $region53: #{tpu_custom_call.1} parent=11 // pred_check
          %p470 = pneg %p284
        $region54: #{tpu_custom_call.1} parent=11 // pred_check_branch
          %472 = sbr.rel (%p470) target = $region56
        $region55: #{tpu_custom_call.1} parent=11 // pred_region
          _
        $region56: #{tpu_custom_call.1} parent=11 // pred_fallthru
          _
        // Predicated region
        $region57: #{tpu_custom_call.1} parent=11 // pred_check
          %p473 = pneg %p305
        $region58: #{tpu_custom_call.1} parent=11 // pred_check_branch
          %475 = sbr.rel (%p473) target = $region60
        $region59: #{tpu_custom_call.1} parent=11 // pred_region
          _
        $region60: #{tpu_custom_call.1} parent=11 // pred_fallthru
          _
        // Predicated region
        $region61: #{tpu_custom_call.1} parent=11 // pred_check
          %p476 = pneg %p326
        $region62: #{tpu_custom_call.1} parent=11 // pred_check_branch
          %478 = sbr.rel (%p476) target = $region64
        $region63: #{tpu_custom_call.1} parent=11 // pred_region
          _
        $region64: #{tpu_custom_call.1} parent=11 // pred_fallthru
          _
        // Predicated region
        $region65: #{tpu_custom_call.1} parent=11 // pred_check
          %p479 = pneg %p347
        $region66: #{tpu_custom_call.1} parent=11 // pred_check_branch
          %481 = sbr.rel (%p479) target = $region68
        $region67: #{tpu_custom_call.1} parent=11 // pred_region
          _
        $region68: #{tpu_custom_call.1} parent=11 // pred_fallthru
          _
        // Predicated region
        $region69: #{tpu_custom_call.1} parent=11 // pred_check
          %p482 = pneg %p368
        $region70: #{tpu_custom_call.1} parent=11 // pred_check_branch
          %484 = sbr.rel (%p482) target = $region72
        $region71: #{tpu_custom_call.1} parent=11 // pred_region
          _
        $region72: #{tpu_custom_call.1} parent=11 // pred_fallthru
          _
        // Predicated region
        $region73: #{tpu_custom_call.1} parent=11 // pred_check
          %p485 = pneg %p389
        $region74: #{tpu_custom_call.1} parent=11 // pred_check_branch
          %487 = sbr.rel (%p485) target = $region76
        $region75: #{tpu_custom_call.1} parent=11 // pred_region
          _
        $region76: #{tpu_custom_call.1} parent=11 // pred_fallthru
          _
      $region12: #{tpu_custom_call.1} parent=5 // pred_fallthru
        _
      %p488 = scmp.lt.s32.totalorder %s27, 2
      // Predicated region
      $region77: #{tpu_custom_call.1} parent=5 // pred_check
        %p489 = pneg %p488
      $region78: #{tpu_custom_call.1} parent=5 // pred_check_branch
        %491 = sbr.rel (%p489) target = $region80
      $region79: #{tpu_custom_call.1} parent=5 // pred_region
        // Predicated region
        $region81: #{tpu_custom_call.1} parent=79 // pred_check
          %p492 = pneg %p47
        $region82: #{tpu_custom_call.1} parent=79 // pred_check_branch
          %494 = sbr.rel (%p492) target = $region84
        $region83: #{tpu_custom_call.1} parent=79 // pred_region
          %p495 = scmp.lt.s32.totalorder %s27, 1
          %s496 = scalar_select %p495, %s27, 1
          %s497 = smul.addr %s496, 8
          %s498 = scalar_lea.vmem %s0, %s497
        $region84: #{tpu_custom_call.1} parent=79 // pred_fallthru
          _
      $region80: #{tpu_custom_call.1} parent=5 // pred_fallthru
        _
      %p499 = scmp.le.s32.totalorder 1, %s27
      %p500 = scmp.lt.s32.totalorder %s27, 3
      %p501 = pnand %p499, %p500
      %p502 = pneg %p501
      // Predicated region
      $region85: #{tpu_custom_call.1} parent=5 // pred_check
        _
      $region86: #{tpu_custom_call.1} parent=5 // pred_check_branch
        %504 = sbr.rel (%p501) target = $region88
      $region87: #{tpu_custom_call.1} parent=5 // pred_region
        %s505 = ssub.s32 %s27, 1
        // Predicated region
        $region89: #{tpu_custom_call.1} parent=87 // pred_check
          %p506 = pneg %p158
        $region90: #{tpu_custom_call.1} parent=87 // pred_check_branch
          %508 = sbr.rel (%p506) target = $region92
        $region91: #{tpu_custom_call.1} parent=87 // pred_region
          %509 = dma.done [#allocation3], 256
        $region92: #{tpu_custom_call.1} parent=87 // pred_fallthru
          _
        %p510 = scmp.lt.s32.totalorder %s32, 1
        %s511 = scalar_select %p510, %s32, 1
        %s512 = smul.addr %s511, 8
        %s513 = scalar_lea.vmem %s0, %s512
        %p514 = pneg %p53
        %p515 = pneg %p50
        %p516 = pneg %p74
        %p517 = pneg %p71
        %p518 = pneg %p95
        %p519 = pneg %p92
        %p520 = pneg %p116
        %p521 = pneg %p113
        %p522 = pneg %p137
        %p523 = pneg %p134
        %p524 = pneg %p158
        %p525 = pneg %p155
        %p526 = pneg %p179
        %p527 = pneg %p176
        %p528 = pneg %p200
        %p529 = pneg %p197
        %p530 = pneg %p221
        %p531 = pneg %p218
        %p532 = pneg %p242
        %p533 = pneg %p239
        %p534 = pneg %p263
        %p535 = pneg %p260
        %p536 = pneg %p284
        %p537 = pneg %p281
        %p538 = pneg %p305
        %p539 = pneg %p302
        %p540 = pneg %p326
        %p541 = pneg %p323
        %p542 = pneg %p347
        %p543 = pneg %p344
        %p544 = pneg %p368
        %p545 = pneg %p365
        %p546 = pneg %p389
        %p547 = pneg %p386
        %p548 = pneg %p415
        %p549 = pneg %p412
        %s550 = sand.u32 %s402, 1
        %s551 = scalar_lea.sflag [#allocation4], %s550
        %s552 = sand.u32 %s402, 1
        %s553 = smul.addr %s552, 8
        %s554 = scalar_lea.vmem [#allocation5], %s553
        %p555 = scmp.lt.s32.totalorder %s32, 1
        %s556 = scalar_select %p555, %s32, 1
        %s557 = smul.addr %s556, 8
        %s558 = scalar_lea.vmem %s0, %s557
        %v560 = vld [vmem:[%s558] sm:$0xff]
        %v561 = vld [vmem:[%s7] sm:$0x1]
        %v562 = vld [vmem:[%s8] sm:$0x1]
        %v563 = vld [vmem:[%s9] sm:$0x1]
        %v564 = vld [vmem:[%s10] sm:$0x1]
        %v565 = vld [vmem:[%s11] sm:$0x1]
        %v566 = vld [vmem:[%s12] sm:$0x1]
        %v567 = vld [vmem:[%s13] sm:$0x1]
        %v568 = vld [vmem:[%s14] sm:$0x1]
        %v569 = vld [vmem:[%s15] sm:$0x1]
        %v570 = vld [vmem:[%s16] sm:$0x1]
        %v571 = vpack.c.bf16 %v560, %v560
        %v572 = vld [vmem:[%s1] sm:$0xf]
        %v573 = vld [vmem:[%s1 + $0x4] sm:$0xf]
        %v574 = vld [vmem:[%s1 + $0x8] sm:$0xf]
        %v575 = vld [vmem:[%s1 + $0xc] sm:$0xf]
        %v577 = vlaneseq
        %v578 = vshrl.u32 %v577, 7
        %v579 = vsub.s32 0, %v578
        %v580 = vrot.slane %v561, %v579
        %v586 = vunpack.c.l.b16 %v572
        %v587 = vunpack.c.l.b16 %v573
        %v588 = vunpack.c.l.b16 %v574
        %v589 = vunpack.c.l.b16 %v575
        %v590 = vpack.c.b16 %v587, %v586
        %v591 = vpack.c.b16 %v589, %v588
        %vm594 = vcmask 261120
        %v596 = vsel %vm594, %v571, 0
        %598 = vmatprep.subr.bf16.mxu0 0
        %599 = vmatpush1.bf16.msra.mxu0 %v590
        %600 = vmatprep.subr.bf16.mxu0 0
        %601 = vmatpush1.bf16.msra.mxu0 %v591
        %602 = vmatprep.subr.bf16.mxu0 0
        %603 = vmatpush1.bf16.msra.mxu0 0
        %604 = vmatprep.subr.bf16.mxu0 0
        %605 = vmatpush1.bf16.msra.mxu0 0
        %606 = vmatprep.subr.bf16.mxu0 0
        %607 = vmatpush1.bf16.msra.mxu0 0
        %608 = vmatprep.subr.bf16.mxu0 0
        %609 = vmatpush1.bf16.msra.mxu0 0
        %610 = vmatprep.subr.bf16.mxu0 0
        %611 = vmatpush1.bf16.msra.mxu0 0
        %612 = vmatprep.subr.bf16.mxu0 0
        %613 = vmatpush1.bf16.msra.mxu0 0
        %614 = vmatprep.subr.bf16.mxu0 0
        %615 = vmatpush1.bf16.msra.mxu0 0
        %616 = vmatprep.subr.bf16.mxu0 0
        %617 = vmatpush1.bf16.msra.mxu0 0
        %618 = vmatprep.subr.bf16.mxu0 0
        %619 = vmatpush1.bf16.msra.mxu0 0
        %620 = vmatprep.subr.bf16.mxu0 0
        %621 = vmatpush1.bf16.msra.mxu0 0
        %622 = vmatprep.subr.bf16.mxu0 0
        %623 = vmatpush1.bf16.msra.mxu0 0
        %624 = vmatprep.subr.bf16.mxu0 0
        %625 = vmatpush1.bf16.msra.mxu0 0
        %626 = vmatprep.subr.bf16.mxu0 0
        %627 = vmatpush1.bf16.msra.mxu0 0
        %628 = vmatprep.subr.bf16.mxu0 0
        %629 = vmatpush1.bf16.msra.mxu0 0
        %630 = vmatprep.mubr.bf16.mxu0 0
        %631 = vmatmul.mubr.bf16.gmra.mrb[0].mxu0 %v596
        %v632 = vpop.f32.mrb[0].mxu0
        %v633 = vadd.f32 %v580, %v632
        %v634 = vpop.f32.mrb[0].mxu0
        %v635 = vpop.f32.mrb[0].mxu0
        %v636 = vpop.f32.mrb[0].mxu0
        %637 = vdwg.mxu0
        %v638 = vld [vmem:[%s2] sm:$0xf]
        %v639 = vld [vmem:[%s2 + $0x4] sm:$0xf]
        %v640 = vld [vmem:[%s2 + $0x8] sm:$0xf]
        %v641 = vld [vmem:[%s2 + $0xc] sm:$0xf]
        %v643 = vlaneseq
        %v644 = vshrl.u32 %v643, 7
        %v645 = vsub.s32 0, %v644
        %v646 = vrot.slane %v562, %v645
        %v652 = vunpack.c.l.b16 %v638
        %v653 = vunpack.c.l.b16 %v639
        %v654 = vunpack.c.l.b16 %v640
        %v655 = vunpack.c.l.b16 %v641
        %v656 = vpack.c.b16 %v653, %v652
        %v657 = vpack.c.b16 %v655, %v654
        %660 = vmatprep.subr.bf16.mxu0 0
        %661 = vmatpush1.bf16.msra.mxu0 %v656
        %662 = vmatprep.subr.bf16.mxu0 0
        %663 = vmatpush1.bf16.msra.mxu0 %v657
        %664 = vmatprep.subr.bf16.mxu0 0
        %665 = vmatpush1.bf16.msra.mxu0 0
        %666 = vmatprep.subr.bf16.mxu0 0
        %667 = vmatpush1.bf16.msra.mxu0 0
        %668 = vmatprep.subr.bf16.mxu0 0
        %669 = vmatpush1.bf16.msra.mxu0 0
        %670 = vmatprep.subr.bf16.mxu0 0
        %671 = vmatpush1.bf16.msra.mxu0 0
        %672 = vmatprep.subr.bf16.mxu0 0
        %673 = vmatpush1.bf16.msra.mxu0 0
        %674 = vmatprep.subr.bf16.mxu0 0
        %675 = vmatpush1.bf16.msra.mxu0 0
        %676 = vmatprep.subr.bf16.mxu0 0
        %677 = vmatpush1.bf16.msra.mxu0 0
        %678 = vmatprep.subr.bf16.mxu0 0
        %679 = vmatpush1.bf16.msra.mxu0 0
        %680 = vmatprep.subr.bf16.mxu0 0
        %681 = vmatpush1.bf16.msra.mxu0 0
        %682 = vmatprep.subr.bf16.mxu0 0
        %683 = vmatpush1.bf16.msra.mxu0 0
        %684 = vmatprep.subr.bf16.mxu0 0
        %685 = vmatpush1.bf16.msra.mxu0 0
        %686 = vmatprep.subr.bf16.mxu0 0
        %687 = vmatpush1.bf16.msra.mxu0 0
        %688 = vmatprep.subr.bf16.mxu0 0
        %689 = vmatpush1.bf16.msra.mxu0 0
        %690 = vmatprep.subr.bf16.mxu0 0
        %691 = vmatpush1.bf16.msra.mxu0 0
        %692 = vmatprep.mubr.bf16.mxu0 0
        %693 = vmatmul.mubr.bf16.gmra.mrb[0].mxu0 %v596
        %v694 = vpop.f32.mrb[0].mxu0
        %v695 = vadd.f32 %v646, %v694
        %v696 = vpop.f32.mrb[0].mxu0
        %v697 = vpop.f32.mrb[0].mxu0
        %v698 = vpop.f32.mrb[0].mxu0
        %699 = vdwg.mxu0
        %v700 = vld [vmem:[%s3] sm:$0xf]
        %v701 = vld [vmem:[%s3 + $0x4] sm:$0xf]
        %v702 = vld [vmem:[%s3 + $0x8] sm:$0xf]
        %v703 = vld [vmem:[%s3 + $0xc] sm:$0xf]
        %v705 = vlaneseq
        %v706 = vshrl.u32 %v705, 7
        %v707 = vsub.s32 0, %v706
        %v708 = vrot.slane %v563, %v707
        %v714 = vunpack.c.l.b16 %v700
        %v715 = vunpack.c.l.b16 %v701
        %v716 = vunpack.c.l.b16 %v702
        %v717 = vunpack.c.l.b16 %v703
        %v718 = vpack.c.b16 %v715, %v714
        %v719 = vpack.c.b16 %v717, %v716
        %722 = vmatprep.subr.bf16.mxu0 0
        %723 = vmatpush1.bf16.msra.mxu0 %v718
        %724 = vmatprep.subr.bf16.mxu0 0
        %725 = vmatpush1.bf16.msra.mxu0 %v719
        %726 = vmatprep.subr.bf16.mxu0 0
        %727 = vmatpush1.bf16.msra.mxu0 0
        %728 = vmatprep.subr.bf16.mxu0 0
        %729 = vmatpush1.bf16.msra.mxu0 0
        %730 = vmatprep.subr.bf16.mxu0 0
        %731 = vmatpush1.bf16.msra.mxu0 0
        %732 = vmatprep.subr.bf16.mxu0 0
        %733 = vmatpush1.bf16.msra.mxu0 0
        %734 = vmatprep.subr.bf16.mxu0 0
        %735 = vmatpush1.bf16.msra.mxu0 0
        %736 = vmatprep.subr.bf16.mxu0 0
        %737 = vmatpush1.bf16.msra.mxu0 0
        %738 = vmatprep.subr.bf16.mxu0 0
        %739 = vmatpush1.bf16.msra.mxu0 0
        %740 = vmatprep.subr.bf16.mxu0 0
        %741 = vmatpush1.bf16.msra.mxu0 0
        %742 = vmatprep.subr.bf16.mxu0 0
        %743 = vmatpush1.bf16.msra.mxu0 0
        %744 = vmatprep.subr.bf16.mxu0 0
        %745 = vmatpush1.bf16.msra.mxu0 0
        %746 = vmatprep.subr.bf16.mxu0 0
        %747 = vmatpush1.bf16.msra.mxu0 0
        %748 = vmatprep.subr.bf16.mxu0 0
        %749 = vmatpush1.bf16.msra.mxu0 0
        %750 = vmatprep.subr.bf16.mxu0 0
        %751 = vmatpush1.bf16.msra.mxu0 0
        %752 = vmatprep.subr.bf16.mxu0 0
        %753 = vmatpush1.bf16.msra.mxu0 0
        %754 = vmatprep.mubr.bf16.mxu0 0
        %755 = vmatmul.mubr.bf16.gmra.mrb[0].mxu0 %v596
        %v756 = vpop.f32.mrb[0].mxu0
        %v757 = vadd.f32 %v708, %v756
        %v758 = vpop.f32.mrb[0].mxu0
        %v759 = vpop.f32.mrb[0].mxu0
        %v760 = vpop.f32.mrb[0].mxu0
        %761 = vdwg.mxu0
        %763 = vrot.lane.b32.xlu0 %v633, 120
        %v764 = vpop.permute.xlu0 %763
        %766 = vrot.lane.b32.xlu0 %v633, 112
        %v767 = vpop.permute.xlu0 %766
        %769 = vrot.lane.b32.xlu0 %v633, 104
        %v770 = vpop.permute.xlu0 %769
        %v772 = vcombine.low %v633, %v767
        %v773 = vcombine.high %v633, %v767
        %v775 = vunpack.c.l.s4 1983009808
        %v776 = vunpack.c.0.s8 %v775
        %v777 = vlaneseq
        %v778 = vshrl.u32 %v777, 7
        %v779 = vsub.s32 %v776, %v778
        %v780 = vrot.slane %v772, %v779
        %v782 = vunpack.c.l.s4 1983009808
        %v783 = vunpack.c.0.s8 %v782
        %v784 = vlaneseq
        %v785 = vshrl.u32 %v784, 7
        %v786 = vsub.s32 %v783, %v785
        %v787 = vrot.slane %v773, %v786
        %v788 = vcombine.low %v764, %v770
        %v789 = vcombine.high %v764, %v770
        %v791 = vunpack.c.l.s4 1983009808
        %v792 = vunpack.c.0.s8 %v791
        %v793 = vlaneseq
        %v794 = vshrl.u32 %v793, 7
        %v795 = vsub.s32 %v792, %v794
        %v796 = vrot.slane %v788, %v795
        %v798 = vunpack.c.l.s4 1983009808
        %v799 = vunpack.c.0.s8 %v798
        %v800 = vlaneseq
        %v801 = vshrl.u32 %v800, 7
        %v802 = vsub.s32 %v799, %v801
        %v803 = vrot.slane %v789, %v802
        %v804 = vcombine.low %v780, %v796
        %v805 = vcombine.high %v780, %v796
        %v807 = vunpack.c.l.s4 1934713408
        %v808 = vunpack.c.0.s8 %v807
        %v809 = vlaneseq
        %v810 = vshrl.u32 %v809, 7
        %v811 = vsub.s32 %v808, %v810
        %v812 = vrot.slane %v804, %v811
        %v814 = vunpack.c.l.s4 1934713408
        %v815 = vunpack.c.0.s8 %v814
        %v816 = vlaneseq
        %v817 = vshrl.u32 %v816, 7
        %v818 = vsub.s32 %v815, %v817
        %v819 = vrot.slane %v805, %v818
        %v820 = vcombine.low %v787, %v803
        %v821 = vcombine.high %v787, %v803
        %v823 = vunpack.c.l.s4 1934713408
        %v824 = vunpack.c.0.s8 %v823
        %v825 = vlaneseq
        %v826 = vshrl.u32 %v825, 7
        %v827 = vsub.s32 %v824, %v826
        %v828 = vrot.slane %v820, %v827
        %v830 = vunpack.c.l.s4 1934713408
        %v831 = vunpack.c.0.s8 %v830
        %v832 = vlaneseq
        %v833 = vshrl.u32 %v832, 7
        %v834 = vsub.s32 %v831, %v833
        %v835 = vrot.slane %v821, %v834
        %v836 = vcombine.high %v812, 0.0
        %v837 = vcombine.high %v819, 0.0
        %v838 = vcombine.high %v828, 0.0
        %v839 = vcombine.high %v835, 0.0
        %v840 = vcombine.low %v812, %v819
        %v842 = vunpack.c.l.s4 1983009808
        %v843 = vunpack.c.0.s8 %v842
        %v844 = vlaneseq
        %v845 = vshrl.u32 %v844, 7
        %v846 = vsub.s32 %v843, %v845
        %v847 = vrot.slane %v840, %v846
        %v848 = vcombine.low %v836, %v837
        %v850 = vunpack.c.l.s4 1983009808
        %v851 = vunpack.c.0.s8 %v850
        %v852 = vlaneseq
        %v853 = vshrl.u32 %v852, 7
        %v854 = vsub.s32 %v851, %v853
        %v855 = vrot.slane %v848, %v854
        %v856 = vcombine.low %v828, %v835
        %v858 = vunpack.c.l.s4 1983009808
        %v859 = vunpack.c.0.s8 %v858
        %v860 = vlaneseq
        %v861 = vshrl.u32 %v860, 7
        %v862 = vsub.s32 %v859, %v861
        %v863 = vrot.slane %v856, %v862
        %v864 = vcombine.low %v838, %v839
        %v866 = vunpack.c.l.s4 1983009808
        %v867 = vunpack.c.0.s8 %v866
        %v868 = vlaneseq
        %v869 = vshrl.u32 %v868, 7
        %v870 = vsub.s32 %v867, %v869
        %v871 = vrot.slane %v864, %v870
        %v872 = vcombine.low %v847, %v855
        %v873 = vcombine.high %v847, %v855
        %v875 = vunpack.c.l.s4 1934713408
        %v876 = vunpack.c.0.s8 %v875
        %v877 = vlaneseq
        %v878 = vshrl.u32 %v877, 7
        %v879 = vsub.s32 %v876, %v878
        %v880 = vrot.slane %v872, %v879
        %v882 = vunpack.c.l.s4 1934713408
        %v883 = vunpack.c.0.s8 %v882
        %v884 = vlaneseq
        %v885 = vshrl.u32 %v884, 7
        %v886 = vsub.s32 %v883, %v885
        %v887 = vrot.slane %v873, %v886
        %v888 = vcombine.low %v863, %v871
        %v889 = vcombine.high %v863, %v871
        %v891 = vunpack.c.l.s4 1934713408
        %v892 = vunpack.c.0.s8 %v891
        %v893 = vlaneseq
        %v894 = vshrl.u32 %v893, 7
        %v895 = vsub.s32 %v892, %v894
        %v896 = vrot.slane %v888, %v895
        %v898 = vunpack.c.l.s4 1934713408
        %v899 = vunpack.c.0.s8 %v898
        %v900 = vlaneseq
        %v901 = vshrl.u32 %v900, 7
        %v902 = vsub.s32 %v899, %v901
        %v903 = vrot.slane %v889, %v902
        %v904 = vcombine.low %v880, %v896
        %v905 = vcombine.high %v880, %v896
        %v906 = vcombine.low %v887, %v903
        %v907 = vcombine.high %v887, %v903
        %v908 = vmul.f32 %v904, 0.35355338
        %v909 = vmul.f32 %v905, 0.35355338
        %v910 = vmul.f32 %v906, 0.35355338
        %v911 = vmul.f32 %v907, 0.35355338
        %913 = vrot.lane.b32.xlu0 %v695, 120
        %v914 = vpop.permute.xlu0 %913
        %916 = vrot.lane.b32.xlu0 %v695, 112
        %v917 = vpop.permute.xlu0 %916
        %919 = vrot.lane.b32.xlu0 %v695, 104
        %v920 = vpop.permute.xlu0 %919
        %v922 = vcombine.low %v695, %v917
        %v923 = vcombine.high %v695, %v917
        %v925 = vunpack.c.l.s4 1983009808
        %v926 = vunpack.c.0.s8 %v925
        %v927 = vlaneseq
        %v928 = vshrl.u32 %v927, 7
        %v929 = vsub.s32 %v926, %v928
        %v930 = vrot.slane %v922, %v929
        %v932 = vunpack.c.l.s4 1983009808
        %v933 = vunpack.c.0.s8 %v932
        %v934 = vlaneseq
        %v935 = vshrl.u32 %v934, 7
        %v936 = vsub.s32 %v933, %v935
        %v937 = vrot.slane %v923, %v936
        %v938 = vcombine.low %v914, %v920
        %v939 = vcombine.high %v914, %v920
        %v941 = vunpack.c.l.s4 1983009808
        %v942 = vunpack.c.0.s8 %v941
        %v943 = vlaneseq
        %v944 = vshrl.u32 %v943, 7
        %v945 = vsub.s32 %v942, %v944
        %v946 = vrot.slane %v938, %v945
        %v948 = vunpack.c.l.s4 1983009808
        %v949 = vunpack.c.0.s8 %v948
        %v950 = vlaneseq
        %v951 = vshrl.u32 %v950, 7
        %v952 = vsub.s32 %v949, %v951
        %v953 = vrot.slane %v939, %v952
        %v954 = vcombine.low %v930, %v946
        %v955 = vcombine.high %v930, %v946
        %v957 = vunpack.c.l.s4 1934713408
        %v958 = vunpack.c.0.s8 %v957
        %v959 = vlaneseq
        %v960 = vshrl.u32 %v959, 7
        %v961 = vsub.s32 %v958, %v960
        %v962 = vrot.slane %v954, %v961
        %v964 = vunpack.c.l.s4 1934713408
        %v965 = vunpack.c.0.s8 %v964
        %v966 = vlaneseq
        %v967 = vshrl.u32 %v966, 7
        %v968 = vsub.s32 %v965, %v967
        %v969 = vrot.slane %v955, %v968
        %v970 = vcombine.low %v937, %v953
        %v971 = vcombine.high %v937, %v953
        %v973 = vunpack.c.l.s4 1934713408
        %v974 = vunpack.c.0.s8 %v973
        %v975 = vlaneseq
        %v976 = vshrl.u32 %v975, 7
        %v977 = vsub.s32 %v974, %v976
        %v978 = vrot.slane %v970, %v977
        %v980 = vunpack.c.l.s4 1934713408
        %v981 = vunpack.c.0.s8 %v980
        %v982 = vlaneseq
        %v983 = vshrl.u32 %v982, 7
        %v984 = vsub.s32 %v981, %v983
        %v985 = vrot.slane %v971, %v984
        %v986 = vcombine.high %v962, 0.0
        %v987 = vcombine.high %v969, 0.0
        %v988 = vcombine.high %v978, 0.0
        %v989 = vcombine.high %v985, 0.0
        %v990 = vcombine.low %v962, %v969
        %v992 = vunpack.c.l.s4 1983009808
        %v993 = vunpack.c.0.s8 %v992
        %v994 = vlaneseq
        %v995 = vshrl.u32 %v994, 7
        %v996 = vsub.s32 %v993, %v995
        %v997 = vrot.slane %v990, %v996
        %v998 = vcombine.low %v986, %v987
        %v1000 = vunpack.c.l.s4 1983009808
        %v1001 = vunpack.c.0.s8 %v1000
        %v1002 = vlaneseq
        %v1003 = vshrl.u32 %v1002, 7
        %v1004 = vsub.s32 %v1001, %v1003
        %v1005 = vrot.slane %v998, %v1004
        %v1006 = vcombine.low %v978, %v985
        %v1008 = vunpack.c.l.s4 1983009808
        %v1009 = vunpack.c.0.s8 %v1008
        %v1010 = vlaneseq
        %v1011 = vshrl.u32 %v1010, 7
        %v1012 = vsub.s32 %v1009, %v1011
        %v1013 = vrot.slane %v1006, %v1012
        %v1014 = vcombine.low %v988, %v989
        %v1016 = vunpack.c.l.s4 1983009808
        %v1017 = vunpack.c.0.s8 %v1016
        %v1018 = vlaneseq
        %v1019 = vshrl.u32 %v1018, 7
        %v1020 = vsub.s32 %v1017, %v1019
        %v1021 = vrot.slane %v1014, %v1020
        %v1022 = vcombine.low %v997, %v1005
        %v1023 = vcombine.high %v997, %v1005
        %v1025 = vunpack.c.l.s4 1934713408
        %v1026 = vunpack.c.0.s8 %v1025
        %v1027 = vlaneseq
        %v1028 = vshrl.u32 %v1027, 7
        %v1029 = vsub.s32 %v1026, %v1028
        %v1030 = vrot.slane %v1022, %v1029
        %v1032 = vunpack.c.l.s4 1934713408
        %v1033 = vunpack.c.0.s8 %v1032
        %v1034 = vlaneseq
        %v1035 = vshrl.u32 %v1034, 7
        %v1036 = vsub.s32 %v1033, %v1035
        %v1037 = vrot.slane %v1023, %v1036
        %v1038 = vcombine.low %v1013, %v1021
        %v1039 = vcombine.high %v1013, %v1021
        %v1041 = vunpack.c.l.s4 1934713408
        %v1042 = vunpack.c.0.s8 %v1041
        %v1043 = vlaneseq
        %v1044 = vshrl.u32 %v1043, 7
        %v1045 = vsub.s32 %v1042, %v1044
        %v1046 = vrot.slane %v1038, %v1045
        %v1048 = vunpack.c.l.s4 1934713408
        %v1049 = vunpack.c.0.s8 %v1048
        %v1050 = vlaneseq
        %v1051 = vshrl.u32 %v1050, 7
        %v1052 = vsub.s32 %v1049, %v1051
        %v1053 = vrot.slane %v1039, %v1052
        %v1054 = vcombine.low %v1030, %v1046
        %v1055 = vcombine.high %v1030, %v1046
        %v1056 = vcombine.low %v1037, %v1053
        %v1057 = vcombine.high %v1037, %v1053
        %1059 = vrot.lane.b32.xlu0 %v757, 120
        %v1060 = vpop.permute.xlu0 %1059
        %1062 = vrot.lane.b32.xlu0 %v757, 112
        %v1063 = vpop.permute.xlu0 %1062
        %1065 = vrot.lane.b32.xlu0 %v757, 104
        %v1066 = vpop.permute.xlu0 %1065
        %v1068 = vcombine.low %v757, %v1063
        %v1069 = vcombine.high %v757, %v1063
        %v1071 = vunpack.c.l.s4 1983009808
        %v1072 = vunpack.c.0.s8 %v1071
        %v1073 = vlaneseq
        %v1074 = vshrl.u32 %v1073, 7
        %v1075 = vsub.s32 %v1072, %v1074
        %v1076 = vrot.slane %v1068, %v1075
        %v1078 = vunpack.c.l.s4 1983009808
        %v1079 = vunpack.c.0.s8 %v1078
        %v1080 = vlaneseq
        %v1081 = vshrl.u32 %v1080, 7
        %v1082 = vsub.s32 %v1079, %v1081
        %v1083 = vrot.slane %v1069, %v1082
        %v1084 = vcombine.low %v1060, %v1066
        %v1085 = vcombine.high %v1060, %v1066
        %v1087 = vunpack.c.l.s4 1983009808
        %v1088 = vunpack.c.0.s8 %v1087
        %v1089 = vlaneseq
        %v1090 = vshrl.u32 %v1089, 7
        %v1091 = vsub.s32 %v1088, %v1090
        %v1092 = vrot.slane %v1084, %v1091
        %v1094 = vunpack.c.l.s4 1983009808
        %v1095 = vunpack.c.0.s8 %v1094
        %v1096 = vlaneseq
        %v1097 = vshrl.u32 %v1096, 7
        %v1098 = vsub.s32 %v1095, %v1097
        %v1099 = vrot.slane %v1085, %v1098
        %v1100 = vcombine.low %v1076, %v1092
        %v1101 = vcombine.high %v1076, %v1092
        %v1103 = vunpack.c.l.s4 1934713408
        %v1104 = vunpack.c.0.s8 %v1103
        %v1105 = vlaneseq
        %v1106 = vshrl.u32 %v1105, 7
        %v1107 = vsub.s32 %v1104, %v1106
        %v1108 = vrot.slane %v1100, %v1107
        %v1110 = vunpack.c.l.s4 1934713408
        %v1111 = vunpack.c.0.s8 %v1110
        %v1112 = vlaneseq
        %v1113 = vshrl.u32 %v1112, 7
        %v1114 = vsub.s32 %v1111, %v1113
        %v1115 = vrot.slane %v1101, %v1114
        %v1116 = vcombine.low %v1083, %v1099
        %v1117 = vcombine.high %v1083, %v1099
        %v1119 = vunpack.c.l.s4 1934713408
        %v1120 = vunpack.c.0.s8 %v1119
        %v1121 = vlaneseq
        %v1122 = vshrl.u32 %v1121, 7
        %v1123 = vsub.s32 %v1120, %v1122
        %v1124 = vrot.slane %v1116, %v1123
        %v1126 = vunpack.c.l.s4 1934713408
        %v1127 = vunpack.c.0.s8 %v1126
        %v1128 = vlaneseq
        %v1129 = vshrl.u32 %v1128, 7
        %v1130 = vsub.s32 %v1127, %v1129
        %v1131 = vrot.slane %v1117, %v1130
        %v1132 = vcombine.high %v1108, 0.0
        %v1133 = vcombine.high %v1115, 0.0
        %v1134 = vcombine.high %v1124, 0.0
        %v1135 = vcombine.high %v1131, 0.0
        %v1136 = vcombine.low %v1108, %v1115
        %v1138 = vunpack.c.l.s4 1983009808
        %v1139 = vunpack.c.0.s8 %v1138
        %v1140 = vlaneseq
        %v1141 = vshrl.u32 %v1140, 7
        %v1142 = vsub.s32 %v1139, %v1141
        %v1143 = vrot.slane %v1136, %v1142
        %v1144 = vcombine.low %v1132, %v1133
        %v1146 = vunpack.c.l.s4 1983009808
        %v1147 = vunpack.c.0.s8 %v1146
        %v1148 = vlaneseq
        %v1149 = vshrl.u32 %v1148, 7
        %v1150 = vsub.s32 %v1147, %v1149
        %v1151 = vrot.slane %v1144, %v1150
        %v1152 = vcombine.low %v1124, %v1131
        %v1154 = vunpack.c.l.s4 1983009808
        %v1155 = vunpack.c.0.s8 %v1154
        %v1156 = vlaneseq
        %v1157 = vshrl.u32 %v1156, 7
        %v1158 = vsub.s32 %v1155, %v1157
        %v1159 = vrot.slane %v1152, %v1158
        %v1160 = vcombine.low %v1134, %v1135
        %v1162 = vunpack.c.l.s4 1983009808
        %v1163 = vunpack.c.0.s8 %v1162
        %v1164 = vlaneseq
        %v1165 = vshrl.u32 %v1164, 7
        %v1166 = vsub.s32 %v1163, %v1165
        %v1167 = vrot.slane %v1160, %v1166
        %v1168 = vcombine.low %v1143, %v1151
        %v1169 = vcombine.high %v1143, %v1151
        %v1171 = vunpack.c.l.s4 1934713408
        %v1172 = vunpack.c.0.s8 %v1171
        %v1173 = vlaneseq
        %v1174 = vshrl.u32 %v1173, 7
        %v1175 = vsub.s32 %v1172, %v1174
        %v1176 = vrot.slane %v1168, %v1175
        %v1178 = vunpack.c.l.s4 1934713408
        %v1179 = vunpack.c.0.s8 %v1178
        %v1180 = vlaneseq
        %v1181 = vshrl.u32 %v1180, 7
        %v1182 = vsub.s32 %v1179, %v1181
        %v1183 = vrot.slane %v1169, %v1182
        %v1184 = vcombine.low %v1159, %v1167
        %v1185 = vcombine.high %v1159, %v1167
        %v1187 = vunpack.c.l.s4 1934713408
        %v1188 = vunpack.c.0.s8 %v1187
        %v1189 = vlaneseq
        %v1190 = vshrl.u32 %v1189, 7
        %v1191 = vsub.s32 %v1188, %v1190
        %v1192 = vrot.slane %v1184, %v1191
        %v1194 = vunpack.c.l.s4 1934713408
        %v1195 = vunpack.c.0.s8 %v1194
        %v1196 = vlaneseq
        %v1197 = vshrl.u32 %v1196, 7
        %v1198 = vsub.s32 %v1195, %v1197
        %v1199 = vrot.slane %v1185, %v1198
        %v1200 = vcombine.low %v1176, %v1192
        %v1201 = vcombine.high %v1176, %v1192
        %v1202 = vcombine.low %v1183, %v1199
        %v1203 = vcombine.high %v1183, %v1199
        %v1204 = vpack.c.bf16 %v908, %v908
        %v1205 = vpack.c.bf16 %v909, %v909
        %v1206 = vpack.c.bf16 %v910, %v910
        %v1207 = vpack.c.bf16 %v911, %v911
        %v1208 = vpack.c.bf16 %v1054, %v1054
        %v1209 = vpack.c.bf16 %v1055, %v1055
        %v1210 = vpack.c.bf16 %v1056, %v1056
        %v1211 = vpack.c.bf16 %v1057, %v1057
        %vm1212 = vcmask 64512
        %v1214 = vsel %vm1212, %v1204, 0
        %v1217 = vsel %vm1212, %v1208, 0
        %1219 = vmatprep.subr.bf16.mxu0 0
        %1220 = vmatpush1.bf16.xpose.msra.mxu0 %v1217
        %1221 = vmatprep.subr.bf16.mxu0 0
        %1222 = vmatpush1.bf16.xpose.msra.mxu0 0
        %1223 = vmatprep.subr.bf16.mxu0 0
        %1224 = vmatpush1.bf16.xpose.msra.mxu0 0
        %1225 = vmatprep.subr.bf16.mxu0 0
        %1226 = vmatpush1.bf16.xpose.msra.mxu0 0
        %1227 = vmatprep.subr.bf16.mxu0 0
        %1228 = vmatpush1.bf16.xpose.msra.mxu0 0
        %1229 = vmatprep.subr.bf16.mxu0 0
        %1230 = vmatpush1.bf16.xpose.msra.mxu0 0
        %1231 = vmatprep.subr.bf16.mxu0 0
        %1232 = vmatpush1.bf16.xpose.msra.mxu0 0
        %1233 = vmatprep.subr.bf16.mxu0 0
        %1234 = vmatpush1.bf16.xpose.msra.mxu0 0
        %1235 = vmatprep.subr.bf16.mxu0 0
        %1236 = vmatpush1.bf16.xpose.msra.mxu0 0
        %1237 = vmatprep.subr.bf16.mxu0 0
        %1238 = vmatpush1.bf16.xpose.msra.mxu0 0
        %1239 = vmatprep.subr.bf16.mxu0 0
        %1240 = vmatpush1.bf16.xpose.msra.mxu0 0
        %1241 = vmatprep.subr.bf16.mxu0 0
        %1242 = vmatpush1.bf16.xpose.msra.mxu0 0
        %1243 = vmatprep.subr.bf16.mxu0 0
        %1244 = vmatpush1.bf16.xpose.msra.mxu0 0
        %1245 = vmatprep.subr.bf16.mxu0 0
        %1246 = vmatpush1.bf16.xpose.msra.mxu0 0
        %1247 = vmatprep.subr.bf16.mxu0 0
        %1248 = vmatpush1.bf16.xpose.msra.mxu0 0
        %1249 = vmatprep.subr.bf16.mxu0 0
        %1250 = vmatpush1.bf16.xpose.msra.mxu0 0
        %1251 = vmatprep.mubr.bf16.mxu0 0
        %1252 = vmatmul.mubr.bf16.gmra.mrb[0].mxu0 %v1214
        %v1253 = vpop.f32.mrb[0].mxu0
        %v1254 = vadd.f32 0.0, %v1253
        %v1255 = vpop.f32.mrb[0].mxu0
        %v1256 = vpop.f32.mrb[0].mxu0
        %v1257 = vpop.f32.mrb[0].mxu0
        %1258 = vdwg.mxu0
        %v1260 = vsel %vm1212, %v1205, 0
        %v1263 = vsel %vm1212, %v1209, 0
        %1265 = vmatprep.subr.bf16.mxu0 0
        %1266 = vmatpush1.bf16.xpose.msra.mxu0 %v1263
        %1267 = vmatprep.subr.bf16.mxu0 0
        %1268 = vmatpush1.bf16.xpose.msra.mxu0 0
        %1269 = vmatprep.subr.bf16.mxu0 0
        %1270 = vmatpush1.bf16.xpose.msra.mxu0 0
        %1271 = vmatprep.subr.bf16.mxu0 0
        %1272 = vmatpush1.bf16.xpose.msra.mxu0 0
        %1273 = vmatprep.subr.bf16.mxu0 0
        %1274 = vmatpush1.bf16.xpose.msra.mxu0 0
        %1275 = vmatprep.subr.bf16.mxu0 0
        %1276 = vmatpush1.bf16.xpose.msra.mxu0 0
        %1277 = vmatprep.subr.bf16.mxu0 0
        %1278 = vmatpush1.bf16.xpose.msra.mxu0 0
        %1279 = vmatprep.subr.bf16.mxu0 0
        %1280 = vmatpush1.bf16.xpose.msra.mxu0 0
        %1281 = vmatprep.subr.bf16.mxu0 0
        %1282 = vmatpush1.bf16.xpose.msra.mxu0 0
        %1283 = vmatprep.subr.bf16.mxu0 0
        %1284 = vmatpush1.bf16.xpose.msra.mxu0 0
        %1285 = vmatprep.subr.bf16.mxu0 0
        %1286 = vmatpush1.bf16.xpose.msra.mxu0 0
        %1287 = vmatprep.subr.bf16.mxu0 0
        %1288 = vmatpush1.bf16.xpose.msra.mxu0 0
        %1289 = vmatprep.subr.bf16.mxu0 0
        %1290 = vmatpush1.bf16.xpose.msra.mxu0 0
        %1291 = vmatprep.subr.bf16.mxu0 0
        %1292 = vmatpush1.bf16.xpose.msra.mxu0 0
        %1293 = vmatprep.subr.bf16.mxu0 0
        %1294 = vmatpush1.bf16.xpose.msra.mxu0 0
        %1295 = vmatprep.subr.bf16.mxu0 0
        %1296 = vmatpush1.bf16.xpose.msra.mxu0 0
        %1297 = vmatprep.mubr.bf16.mxu0 0
        %1298 = vmatmul.mubr.bf16.gmra.mrb[0].mxu0 %v1260
        %v1299 = vpop.f32.mrb[0].mxu0
        %v1300 = vadd.f32 0.0, %v1299
        %v1301 = vpop.f32.mrb[0].mxu0
        %v1302 = vpop.f32.mrb[0].mxu0
        %v1303 = vpop.f32.mrb[0].mxu0
        %1304 = vdwg.mxu0
        %v1306 = vsel %vm1212, %v1206, 0
        %v1309 = vsel %vm1212, %v1210, 0
        %1311 = vmatprep.subr.bf16.mxu0 0
        %1312 = vmatpush1.bf16.xpose.msra.mxu0 %v1309
        %1313 = vmatprep.subr.bf16.mxu0 0
        %1314 = vmatpush1.bf16.xpose.msra.mxu0 0
        %1315 = vmatprep.subr.bf16.mxu0 0
        %1316 = vmatpush1.bf16.xpose.msra.mxu0 0
        %1317 = vmatprep.subr.bf16.mxu0 0
        %1318 = vmatpush1.bf16.xpose.msra.mxu0 0
        %1319 = vmatprep.subr.bf16.mxu0 0
        %1320 = vmatpush1.bf16.xpose.msra.mxu0 0
        %1321 = vmatprep.subr.bf16.mxu0 0
        %1322 = vmatpush1.bf16.xpose.msra.mxu0 0
        %1323 = vmatprep.subr.bf16.mxu0 0
        %1324 = vmatpush1.bf16.xpose.msra.mxu0 0
        %1325 = vmatprep.subr.bf16.mxu0 0
        %1326 = vmatpush1.bf16.xpose.msra.mxu0 0
        %1327 = vmatprep.subr.bf16.mxu0 0
        %1328 = vmatpush1.bf16.xpose.msra.mxu0 0
        %1329 = vmatprep.subr.bf16.mxu0 0
        %1330 = vmatpush1.bf16.xpose.msra.mxu0 0
        %1331 = vmatprep.subr.bf16.mxu0 0
        %1332 = vmatpush1.bf16.xpose.msra.mxu0 0
        %1333 = vmatprep.subr.bf16.mxu0 0
        %1334 = vmatpush1.bf16.xpose.msra.mxu0 0
        %1335 = vmatprep.subr.bf16.mxu0 0
        %1336 = vmatpush1.bf16.xpose.msra.mxu0 0
        %1337 = vmatprep.subr.bf16.mxu0 0
        %1338 = vmatpush1.bf16.xpose.msra.mxu0 0
        %1339 = vmatprep.subr.bf16.mxu0 0
        %1340 = vmatpush1.bf16.xpose.msra.mxu0 0
        %1341 = vmatprep.subr.bf16.mxu0 0
        %1342 = vmatpush1.bf16.xpose.msra.mxu0 0
        %1343 = vmatprep.mubr.bf16.mxu0 0
        %1344 = vmatmul.mubr.bf16.gmra.mrb[0].mxu0 %v1306
        %v1345 = vpop.f32.mrb[0].mxu0
        %v1346 = vadd.f32 0.0, %v1345
        %v1347 = vpop.f32.mrb[0].mxu0
        %v1348 = vpop.f32.mrb[0].mxu0
        %v1349 = vpop.f32.mrb[0].mxu0
        %1350 = vdwg.mxu0
        %v1352 = vsel %vm1212, %v1207, 0
        %v1355 = vsel %vm1212, %v1211, 0
        %1357 = vmatprep.subr.bf16.mxu0 0
        %1358 = vmatpush1.bf16.xpose.msra.mxu0 %v1355
        %1359 = vmatprep.subr.bf16.mxu0 0
        %1360 = vmatpush1.bf16.xpose.msra.mxu0 0
        %1361 = vmatprep.subr.bf16.mxu0 0
        %1362 = vmatpush1.bf16.xpose.msra.mxu0 0
        %1363 = vmatprep.subr.bf16.mxu0 0
        %1364 = vmatpush1.bf16.xpose.msra.mxu0 0
        %1365 = vmatprep.subr.bf16.mxu0 0
        %1366 = vmatpush1.bf16.xpose.msra.mxu0 0
        %1367 = vmatprep.subr.bf16.mxu0 0
        %1368 = vmatpush1.bf16.xpose.msra.mxu0 0
        %1369 = vmatprep.subr.bf16.mxu0 0
        %1370 = vmatpush1.bf16.xpose.msra.mxu0 0
        %1371 = vmatprep.subr.bf16.mxu0 0
        %1372 = vmatpush1.bf16.xpose.msra.mxu0 0
        %1373 = vmatprep.subr.bf16.mxu0 0
        %1374 = vmatpush1.bf16.xpose.msra.mxu0 0
        %1375 = vmatprep.subr.bf16.mxu0 0
        %1376 = vmatpush1.bf16.xpose.msra.mxu0 0
        %1377 = vmatprep.subr.bf16.mxu0 0
        %1378 = vmatpush1.bf16.xpose.msra.mxu0 0
        %1379 = vmatprep.subr.bf16.mxu0 0
        %1380 = vmatpush1.bf16.xpose.msra.mxu0 0
        %1381 = vmatprep.subr.bf16.mxu0 0
        %1382 = vmatpush1.bf16.xpose.msra.mxu0 0
        %1383 = vmatprep.subr.bf16.mxu0 0
        %1384 = vmatpush1.bf16.xpose.msra.mxu0 0
        %1385 = vmatprep.subr.bf16.mxu0 0
        %1386 = vmatpush1.bf16.xpose.msra.mxu0 0
        %1387 = vmatprep.subr.bf16.mxu0 0
        %1388 = vmatpush1.bf16.xpose.msra.mxu0 0
        %1389 = vmatprep.mubr.bf16.mxu0 0
        %1390 = vmatmul.mubr.bf16.gmra.mrb[0].mxu0 %v1352
        %v1391 = vpop.f32.mrb[0].mxu0
        %v1392 = vadd.f32 0.0, %v1391
        %v1393 = vpop.f32.mrb[0].mxu0
        %v1394 = vpop.f32.mrb[0].mxu0
        %v1395 = vpop.f32.mrb[0].mxu0
        %1396 = vdwg.mxu0
        %v1397 = vsel %vm1212, %v1254, -inf
        %1398 = vmax.xlane.f32.xlu0 %v1397
        %v1399 = vpop.xlane.xlu0 %1398
        %v1400 = vsel %vm1212, %v1300, -inf
        %1401 = vmax.xlane.f32.xlu0 %v1400
        %v1402 = vpop.xlane.xlu0 %1401
        %v1403 = vsel %vm1212, %v1346, -inf
        %1404 = vmax.xlane.f32.xlu0 %v1403
        %v1405 = vpop.xlane.xlu0 %1404
        %v1406 = vsel %vm1212, %v1392, -inf
        %1407 = vmax.xlane.f32.xlu0 %v1406
        %v1408 = vpop.xlane.xlu0 %1407
        %v1409 = vsub.f32 %v1254, %v1399
        %v1410 = vsub.f32 %v1300, %v1402
        %v1411 = vsub.f32 %v1346, %v1405
        %v1412 = vsub.f32 %v1392, %v1408
        %v1413 = vmul.f32 %v1409, 1.442695
        %v1414 = vpow.pop %v1413
        %v1415 = vmul.f32 %v1410, 1.442695
        %v1416 = vpow.pop %v1415
        %v1417 = vmul.f32 %v1411, 1.442695
        %v1418 = vpow.pop %v1417
        %v1419 = vmul.f32 %v1412, 1.442695
        %v1420 = vpow.pop %v1419
        %v1421 = vsel %vm1212, %v1414, 0.0
        %1422 = vadd.xlane.f32.xlu0 %v1421
        %v1423 = vpop.xlane.xlu0 %1422
        %v1424 = vsel %vm1212, %v1416, 0.0
        %1425 = vadd.xlane.f32.xlu0 %v1424
        %v1426 = vpop.xlane.xlu0 %1425
        %v1427 = vsel %vm1212, %v1418, 0.0
        %1428 = vadd.xlane.f32.xlu0 %v1427
        %v1429 = vpop.xlane.xlu0 %1428
        %v1430 = vsel %vm1212, %v1420, 0.0
        %1431 = vadd.xlane.f32.xlu0 %v1430
        %v1432 = vpop.xlane.xlu0 %1431
        %v1433 = vpack.c.bf16 %v1414, %v1414
        %v1434 = vpack.c.bf16 %v1416, %v1416
        %v1435 = vpack.c.bf16 %v1418, %v1418
        %v1436 = vpack.c.bf16 %v1420, %v1420
        %v1437 = vpack.c.bf16 %v1200, %v1200
        %v1438 = vpack.c.bf16 %v1201, %v1201
        %v1439 = vpack.c.bf16 %v1202, %v1202
        %v1440 = vpack.c.bf16 %v1203, %v1203
        %v1442 = vsel %vm1212, %v1433, 0
        %vm1444 = vcmask 1043456
        %v1446 = vsel %vm1444, %v1437, 0
        %1448 = vmatprep.subr.bf16.mxu0 0
        %1449 = vmatpush1.bf16.msra.mxu0 %v1446
        %1450 = vmatprep.subr.bf16.mxu0 0
        %1451 = vmatpush1.bf16.msra.mxu0 0
        %1452 = vmatprep.subr.bf16.mxu0 0
        %1453 = vmatpush1.bf16.msra.mxu0 0
        %1454 = vmatprep.subr.bf16.mxu0 0
        %1455 = vmatpush1.bf16.msra.mxu0 0
        %1456 = vmatprep.subr.bf16.mxu0 0
        %1457 = vmatpush1.bf16.msra.mxu0 0
        %1458 = vmatprep.subr.bf16.mxu0 0
        %1459 = vmatpush1.bf16.msra.mxu0 0
        %1460 = vmatprep.subr.bf16.mxu0 0
        %1461 = vmatpush1.bf16.msra.mxu0 0
        %1462 = vmatprep.subr.bf16.mxu0 0
        %1463 = vmatpush1.bf16.msra.mxu0 0
        %1464 = vmatprep.subr.bf16.mxu0 0
        %1465 = vmatpush1.bf16.msra.mxu0 0
        %1466 = vmatprep.subr.bf16.mxu0 0
        %1467 = vmatpush1.bf16.msra.mxu0 0
        %1468 = vmatprep.subr.bf16.mxu0 0
        %1469 = vmatpush1.bf16.msra.mxu0 0
        %1470 = vmatprep.subr.bf16.mxu0 0
        %1471 = vmatpush1.bf16.msra.mxu0 0
        %1472 = vmatprep.subr.bf16.mxu0 0
        %1473 = vmatpush1.bf16.msra.mxu0 0
        %1474 = vmatprep.subr.bf16.mxu0 0
        %1475 = vmatpush1.bf16.msra.mxu0 0
        %1476 = vmatprep.subr.bf16.mxu0 0
        %1477 = vmatpush1.bf16.msra.mxu0 0
        %1478 = vmatprep.subr.bf16.mxu0 0
        %1479 = vmatpush1.bf16.msra.mxu0 0
        %1480 = vmatprep.mubr.bf16.mxu0 0
        %1481 = vmatmul.mubr.bf16.gmra.mrb[0].mxu0 %v1442
        %v1482 = vpop.f32.mrb[0].mxu0
        %v1483 = vadd.f32 0.0, %v1482
        %v1484 = vpop.f32.mrb[0].mxu0
        %v1485 = vpop.f32.mrb[0].mxu0
        %v1486 = vpop.f32.mrb[0].mxu0
        %1487 = vdwg.mxu0
        %v1489 = vsel %vm1212, %v1434, 0
        %v1492 = vsel %vm1444, %v1438, 0
        %1494 = vmatprep.subr.bf16.mxu0 0
        %1495 = vmatpush1.bf16.msra.mxu0 %v1492
        %1496 = vmatprep.subr.bf16.mxu0 0
        %1497 = vmatpush1.bf16.msra.mxu0 0
        %1498 = vmatprep.subr.bf16.mxu0 0
        %1499 = vmatpush1.bf16.msra.mxu0 0
        %1500 = vmatprep.subr.bf16.mxu0 0
        %1501 = vmatpush1.bf16.msra.mxu0 0
        %1502 = vmatprep.subr.bf16.mxu0 0
        %1503 = vmatpush1.bf16.msra.mxu0 0
        %1504 = vmatprep.subr.bf16.mxu0 0
        %1505 = vmatpush1.bf16.msra.mxu0 0
        %1506 = vmatprep.subr.bf16.mxu0 0
        %1507 = vmatpush1.bf16.msra.mxu0 0
        %1508 = vmatprep.subr.bf16.mxu0 0
        %1509 = vmatpush1.bf16.msra.mxu0 0
        %1510 = vmatprep.subr.bf16.mxu0 0
        %1511 = vmatpush1.bf16.msra.mxu0 0
        %1512 = vmatprep.subr.bf16.mxu0 0
        %1513 = vmatpush1.bf16.msra.mxu0 0
        %1514 = vmatprep.subr.bf16.mxu0 0
        %1515 = vmatpush1.bf16.msra.mxu0 0
        %1516 = vmatprep.subr.bf16.mxu0 0
        %1517 = vmatpush1.bf16.msra.mxu0 0
        %1518 = vmatprep.subr.bf16.mxu0 0
        %1519 = vmatpush1.bf16.msra.mxu0 0
        %1520 = vmatprep.subr.bf16.mxu0 0
        %1521 = vmatpush1.bf16.msra.mxu0 0
        %1522 = vmatprep.subr.bf16.mxu0 0
        %1523 = vmatpush1.bf16.msra.mxu0 0
        %1524 = vmatprep.subr.bf16.mxu0 0
        %1525 = vmatpush1.bf16.msra.mxu0 0
        %1526 = vmatprep.mubr.bf16.mxu0 0
        %1527 = vmatmul.mubr.bf16.gmra.mrb[0].mxu0 %v1489
        %v1528 = vpop.f32.mrb[0].mxu0
        %v1529 = vadd.f32 0.0, %v1528
        %v1530 = vpop.f32.mrb[0].mxu0
        %v1531 = vpop.f32.mrb[0].mxu0
        %v1532 = vpop.f32.mrb[0].mxu0
        %1533 = vdwg.mxu0
        %v1535 = vsel %vm1212, %v1435, 0
        %v1538 = vsel %vm1444, %v1439, 0
        %1540 = vmatprep.subr.bf16.mxu0 0
        %1541 = vmatpush1.bf16.msra.mxu0 %v1538
        %1542 = vmatprep.subr.bf16.mxu0 0
        %1543 = vmatpush1.bf16.msra.mxu0 0
        %1544 = vmatprep.subr.bf16.mxu0 0
        %1545 = vmatpush1.bf16.msra.mxu0 0
        %1546 = vmatprep.subr.bf16.mxu0 0
        %1547 = vmatpush1.bf16.msra.mxu0 0
        %1548 = vmatprep.subr.bf16.mxu0 0
        %1549 = vmatpush1.bf16.msra.mxu0 0
        %1550 = vmatprep.subr.bf16.mxu0 0
        %1551 = vmatpush1.bf16.msra.mxu0 0
        %1552 = vmatprep.subr.bf16.mxu0 0
        %1553 = vmatpush1.bf16.msra.mxu0 0
        %1554 = vmatprep.subr.bf16.mxu0 0
        %1555 = vmatpush1.bf16.msra.mxu0 0
        %1556 = vmatprep.subr.bf16.mxu0 0
        %1557 = vmatpush1.bf16.msra.mxu0 0
        %1558 = vmatprep.subr.bf16.mxu0 0
        %1559 = vmatpush1.bf16.msra.mxu0 0
        %1560 = vmatprep.subr.bf16.mxu0 0
        %1561 = vmatpush1.bf16.msra.mxu0 0
        %1562 = vmatprep.subr.bf16.mxu0 0
        %1563 = vmatpush1.bf16.msra.mxu0 0
        %1564 = vmatprep.subr.bf16.mxu0 0
        %1565 = vmatpush1.bf16.msra.mxu0 0
        %1566 = vmatprep.subr.bf16.mxu0 0
        %1567 = vmatpush1.bf16.msra.mxu0 0
        %1568 = vmatprep.subr.bf16.mxu0 0
        %1569 = vmatpush1.bf16.msra.mxu0 0
        %1570 = vmatprep.subr.bf16.mxu0 0
        %1571 = vmatpush1.bf16.msra.mxu0 0
        %1572 = vmatprep.mubr.bf16.mxu0 0
        %1573 = vmatmul.mubr.bf16.gmra.mrb[0].mxu0 %v1535
        %v1574 = vpop.f32.mrb[0].mxu0
        %v1575 = vadd.f32 0.0, %v1574
        %v1576 = vpop.f32.mrb[0].mxu0
        %v1577 = vpop.f32.mrb[0].mxu0
        %v1578 = vpop.f32.mrb[0].mxu0
        %1579 = vdwg.mxu0
        %v1581 = vsel %vm1212, %v1436, 0
        %v1584 = vsel %vm1444, %v1440, 0
        %1586 = vmatprep.subr.bf16.mxu0 0
        %1587 = vmatpush1.bf16.msra.mxu0 %v1584
        %1588 = vmatprep.subr.bf16.mxu0 0
        %1589 = vmatpush1.bf16.msra.mxu0 0
        %1590 = vmatprep.subr.bf16.mxu0 0
        %1591 = vmatpush1.bf16.msra.mxu0 0
        %1592 = vmatprep.subr.bf16.mxu0 0
        %1593 = vmatpush1.bf16.msra.mxu0 0
        %1594 = vmatprep.subr.bf16.mxu0 0
        %1595 = vmatpush1.bf16.msra.mxu0 0
        %1596 = vmatprep.subr.bf16.mxu0 0
        %1597 = vmatpush1.bf16.msra.mxu0 0
        %1598 = vmatprep.subr.bf16.mxu0 0
        %1599 = vmatpush1.bf16.msra.mxu0 0
        %1600 = vmatprep.subr.bf16.mxu0 0
        %1601 = vmatpush1.bf16.msra.mxu0 0
        %1602 = vmatprep.subr.bf16.mxu0 0
        %1603 = vmatpush1.bf16.msra.mxu0 0
        %1604 = vmatprep.subr.bf16.mxu0 0
        %1605 = vmatpush1.bf16.msra.mxu0 0
        %1606 = vmatprep.subr.bf16.mxu0 0
        %1607 = vmatpush1.bf16.msra.mxu0 0
        %1608 = vmatprep.subr.bf16.mxu0 0
        %1609 = vmatpush1.bf16.msra.mxu0 0
        %1610 = vmatprep.subr.bf16.mxu0 0
        %1611 = vmatpush1.bf16.msra.mxu0 0
        %1612 = vmatprep.subr.bf16.mxu0 0
        %1613 = vmatpush1.bf16.msra.mxu0 0
        %1614 = vmatprep.subr.bf16.mxu0 0
        %1615 = vmatpush1.bf16.msra.mxu0 0
        %1616 = vmatprep.subr.bf16.mxu0 0
        %1617 = vmatpush1.bf16.msra.mxu0 0
        %1618 = vmatprep.mubr.bf16.mxu0 0
        %1619 = vmatmul.mubr.bf16.gmra.mrb[0].mxu0 %v1581
        %v1620 = vpop.f32.mrb[0].mxu0
        %v1621 = vadd.f32 0.0, %v1620
        %v1622 = vpop.f32.mrb[0].mxu0
        %v1623 = vpop.f32.mrb[0].mxu0
        %v1624 = vpop.f32.mrb[0].mxu0
        %1625 = vdwg.mxu0
        %v1626 = vrcp.pop %v1423
        %v1627 = vrcp.pop %v1426
        %v1628 = vrcp.pop %v1429
        %v1629 = vrcp.pop %v1432
        %v1630 = vmul.f32 %v1483, %v1626
        %v1631 = vmul.f32 %v1529, %v1627
        %v1632 = vmul.f32 %v1575, %v1628
        %v1633 = vmul.f32 %v1621, %v1629
        %v1634 = vcombine.low %v1630, %v1632
        %v1635 = vcombine.high %v1630, %v1632
        %v1637 = vunpack.c.l.s4 1983009808
        %v1638 = vunpack.c.0.s8 %v1637
        %v1639 = vlaneseq
        %v1640 = vshrl.u32 %v1639, 7
        %v1641 = vsub.s32 %v1638, %v1640
        %v1642 = vrot.slane %v1634, %v1641
        %v1644 = vunpack.c.l.s4 1983009808
        %v1645 = vunpack.c.0.s8 %v1644
        %v1646 = vlaneseq
        %v1647 = vshrl.u32 %v1646, 7
        %v1648 = vsub.s32 %v1645, %v1647
        %v1649 = vrot.slane %v1635, %v1648
        %v1650 = vcombine.low %v1631, %v1633
        %v1651 = vcombine.high %v1631, %v1633
        %v1653 = vunpack.c.l.s4 1983009808
        %v1654 = vunpack.c.0.s8 %v1653
        %v1655 = vlaneseq
        %v1656 = vshrl.u32 %v1655, 7
        %v1657 = vsub.s32 %v1654, %v1656
        %v1658 = vrot.slane %v1650, %v1657
        %v1660 = vunpack.c.l.s4 1983009808
        %v1661 = vunpack.c.0.s8 %v1660
        %v1662 = vlaneseq
        %v1663 = vshrl.u32 %v1662, 7
        %v1664 = vsub.s32 %v1661, %v1663
        %v1665 = vrot.slane %v1651, %v1664
        %v1666 = vcombine.low %v1642, %v1658
        %v1667 = vcombine.high %v1642, %v1658
        %v1669 = vunpack.c.l.s4 1934713408
        %v1670 = vunpack.c.0.s8 %v1669
        %v1671 = vlaneseq
        %v1672 = vshrl.u32 %v1671, 7
        %v1673 = vsub.s32 %v1670, %v1672
        %v1674 = vrot.slane %v1666, %v1673
        %v1676 = vunpack.c.l.s4 1934713408
        %v1677 = vunpack.c.0.s8 %v1676
        %v1678 = vlaneseq
        %v1679 = vshrl.u32 %v1678, 7
        %v1680 = vsub.s32 %v1677, %v1679
        %v1681 = vrot.slane %v1667, %v1680
        %v1682 = vcombine.low %v1649, %v1665
        %v1683 = vcombine.high %v1649, %v1665
        %v1685 = vunpack.c.l.s4 1934713408
        %v1686 = vunpack.c.0.s8 %v1685
        %v1687 = vlaneseq
        %v1688 = vshrl.u32 %v1687, 7
        %v1689 = vsub.s32 %v1686, %v1688
        %v1690 = vrot.slane %v1682, %v1689
        %v1692 = vunpack.c.l.s4 1934713408
        %v1693 = vunpack.c.0.s8 %v1692
        %v1694 = vlaneseq
        %v1695 = vshrl.u32 %v1694, 7
        %v1696 = vsub.s32 %v1693, %v1695
        %v1697 = vrot.slane %v1683, %v1696
        %v1698 = vcombine.high %v1674, 0.0
        %v1699 = vcombine.high %v1681, 0.0
        %v1700 = vcombine.high %v1690, 0.0
        %v1701 = vcombine.high %v1697, 0.0
        %v1702 = vcombine.low %v1674, %v1681
        %v1704 = vunpack.c.l.s4 1983009808
        %v1705 = vunpack.c.0.s8 %v1704
        %v1706 = vlaneseq
        %v1707 = vshrl.u32 %v1706, 7
        %v1708 = vsub.s32 %v1705, %v1707
        %v1709 = vrot.slane %v1702, %v1708
        %v1710 = vcombine.low %v1698, %v1699
        %v1712 = vunpack.c.l.s4 1983009808
        %v1713 = vunpack.c.0.s8 %v1712
        %v1714 = vlaneseq
        %v1715 = vshrl.u32 %v1714, 7
        %v1716 = vsub.s32 %v1713, %v1715
        %v1717 = vrot.slane %v1710, %v1716
        %v1718 = vcombine.low %v1690, %v1697
        %v1720 = vunpack.c.l.s4 1983009808
        %v1721 = vunpack.c.0.s8 %v1720
        %v1722 = vlaneseq
        %v1723 = vshrl.u32 %v1722, 7
        %v1724 = vsub.s32 %v1721, %v1723
        %v1725 = vrot.slane %v1718, %v1724
        %v1726 = vcombine.low %v1700, %v1701
        %v1728 = vunpack.c.l.s4 1983009808
        %v1729 = vunpack.c.0.s8 %v1728
        %v1730 = vlaneseq
        %v1731 = vshrl.u32 %v1730, 7
        %v1732 = vsub.s32 %v1729, %v1731
        %v1733 = vrot.slane %v1726, %v1732
        %v1734 = vcombine.low %v1709, %v1717
        %v1735 = vcombine.high %v1709, %v1717
        %v1737 = vunpack.c.l.s4 1934713408
        %v1738 = vunpack.c.0.s8 %v1737
        %v1739 = vlaneseq
        %v1740 = vshrl.u32 %v1739, 7
        %v1741 = vsub.s32 %v1738, %v1740
        %v1742 = vrot.slane %v1734, %v1741
        %v1744 = vunpack.c.l.s4 1934713408
        %v1745 = vunpack.c.0.s8 %v1744
        %v1746 = vlaneseq
        %v1747 = vshrl.u32 %v1746, 7
        %v1748 = vsub.s32 %v1745, %v1747
        %v1749 = vrot.slane %v1735, %v1748
        %v1750 = vcombine.low %v1725, %v1733
        %v1751 = vcombine.high %v1725, %v1733
        %v1753 = vunpack.c.l.s4 1934713408
        %v1754 = vunpack.c.0.s8 %v1753
        %v1755 = vlaneseq
        %v1756 = vshrl.u32 %v1755, 7
        %v1757 = vsub.s32 %v1754, %v1756
        %v1758 = vrot.slane %v1750, %v1757
        %v1760 = vunpack.c.l.s4 1934713408
        %v1761 = vunpack.c.0.s8 %v1760
        %v1762 = vlaneseq
        %v1763 = vshrl.u32 %v1762, 7
        %v1764 = vsub.s32 %v1761, %v1763
        %v1765 = vrot.slane %v1751, %v1764
        %v1766 = vcombine.low %v1742, %v1758
        %v1767 = vcombine.high %v1742, %v1758
        %v1768 = vcombine.low %v1749, %v1765
        %v1769 = vcombine.high %v1749, %v1765
        %1771 = vrot.lane.b32.xlu0 %v1767, 8
        %v1772 = vpop.permute.xlu0 %1771
        %1775 = vrot.lane.b32.xlu0 %v1768, 16
        %v1776 = vpop.permute.xlu0 %1775
        %1779 = vrot.lane.b32.xlu0 %v1769, 24
        %v1780 = vpop.permute.xlu0 %1779
        %v1782 = vsel %vm1212, %v1766, %v1772
        %vm1783 = vcmask 130048
        %v1784 = vsel %vm1783, %v1782, %v1776
        %vm1785 = vcmask 195584
        %v1786 = vsel %vm1785, %v1784, %v1780
        %v1787 = vpack.c.bf16 %v1786, %v1786
        %v1788 = vld [vmem:[%s4] sm:$0xf]
        %v1789 = vld [vmem:[%s4 + $0x4] sm:$0xf]
        %v1790 = vld [vmem:[%s4 + $0x8] sm:$0xf]
        %v1791 = vld [vmem:[%s4 + $0xc] sm:$0xf]
        %v1793 = vlaneseq
        %v1794 = vshrl.u32 %v1793, 7
        %v1795 = vsub.s32 0, %v1794
        %v1796 = vrot.slane %v564, %v1795
        %v1802 = vunpack.c.l.b16 %v1788
        %v1803 = vunpack.c.l.b16 %v1789
        %v1804 = vunpack.c.l.b16 %v1790
        %v1805 = vunpack.c.l.b16 %v1791
        %v1806 = vpack.c.b16 %v1803, %v1802
        %v1807 = vpack.c.b16 %v1805, %v1804
        %v1811 = vsel %vm594, %v1787, 0
        %1813 = vmatprep.subr.bf16.mxu0 0
        %1814 = vmatpush1.bf16.msra.mxu0 %v1806
        %1815 = vmatprep.subr.bf16.mxu0 0
        %1816 = vmatpush1.bf16.msra.mxu0 %v1807
        %1817 = vmatprep.subr.bf16.mxu0 0
        %1818 = vmatpush1.bf16.msra.mxu0 0
        %1819 = vmatprep.subr.bf16.mxu0 0
        %1820 = vmatpush1.bf16.msra.mxu0 0
        %1821 = vmatprep.subr.bf16.mxu0 0
        %1822 = vmatpush1.bf16.msra.mxu0 0
        %1823 = vmatprep.subr.bf16.mxu0 0
        %1824 = vmatpush1.bf16.msra.mxu0 0
        %1825 = vmatprep.subr.bf16.mxu0 0
        %1826 = vmatpush1.bf16.msra.mxu0 0
        %1827 = vmatprep.subr.bf16.mxu0 0
        %1828 = vmatpush1.bf16.msra.mxu0 0
        %1829 = vmatprep.subr.bf16.mxu0 0
        %1830 = vmatpush1.bf16.msra.mxu0 0
        %1831 = vmatprep.subr.bf16.mxu0 0
        %1832 = vmatpush1.bf16.msra.mxu0 0
        %1833 = vmatprep.subr.bf16.mxu0 0
        %1834 = vmatpush1.bf16.msra.mxu0 0
        %1835 = vmatprep.subr.bf16.mxu0 0
        %1836 = vmatpush1.bf16.msra.mxu0 0
        %1837 = vmatprep.subr.bf16.mxu0 0
        %1838 = vmatpush1.bf16.msra.mxu0 0
        %1839 = vmatprep.subr.bf16.mxu0 0
        %1840 = vmatpush1.bf16.msra.mxu0 0
        %1841 = vmatprep.subr.bf16.mxu0 0
        %1842 = vmatpush1.bf16.msra.mxu0 0
        %1843 = vmatprep.subr.bf16.mxu0 0
        %1844 = vmatpush1.bf16.msra.mxu0 0
        %1845 = vmatprep.mubr.bf16.mxu0 0
        %1846 = vmatmul.mubr.bf16.gmra.mrb[0].mxu0 %v1811
        %v1847 = vpop.f32.mrb[0].mxu0
        %v1848 = vadd.f32 %v1796, %v1847
        %v1849 = vpop.f32.mrb[0].mxu0
        %v1850 = vpop.f32.mrb[0].mxu0
        %v1851 = vpop.f32.mrb[0].mxu0
        %1852 = vdwg.mxu0
        %v1853 = vadd.f32 %v560, %v1848
        %v1854 = vsel %vm594, %v1853, 0.0
        %1855 = vadd.xlane.f32.xlu0 %v1854
        %v1856 = vpop.xlane.xlu0 %1855
        %v1857 = vrcp.pop 32.0
        %v1858 = vmul.f32 %v1856, %v1857
        %v1859 = vsub.f32 %v1853, %v1858
        %v1860 = vmul.f32 %v1859, %v1859
        %v1861 = vsel %vm594, %v1860, 0.0
        %1862 = vadd.xlane.f32.xlu0 %v1861
        %v1863 = vpop.xlane.xlu0 %1862
        %v1864 = vmul.f32 %v1863, %v1857
        %v1865 = vadd.f32 %v1864, 1e-05
        %v1866 = vrsqrt.pop %v1865
        %v1867 = vmul.f32 %v1859, %v1866
        %v1869 = vlaneseq
        %v1870 = vshrl.u32 %v1869, 7
        %v1871 = vsub.s32 0, %v1870
        %v1872 = vrot.slane %v567, %v1871
        %v1874 = vmul.f32 %v1867, %v1872
        %v1876 = vlaneseq
        %v1877 = vshrl.u32 %v1876, 7
        %v1878 = vsub.s32 0, %v1877
        %v1879 = vrot.slane %v568, %v1878
        %v1881 = vadd.f32 %v1874, %v1879
        %v1882 = vpack.c.bf16 %v1881, %v1881
        %v1883 = vld [vmem:[#allocation2] sm:$0xf]
        %v1884 = vld [vmem:[#allocation2 + $0x4] sm:$0xf]
        %v1885 = vld [vmem:[#allocation2 + $0x8] sm:$0xf]
        %v1886 = vld [vmem:[#allocation2 + $0xc] sm:$0xf]
        %v1888 = vlaneseq
        %v1889 = vshrl.u32 %v1888, 7
        %v1890 = vsub.s32 0, %v1889
        %v1891 = vrot.slane %v565, %v1890
        %v1897 = vunpack.c.l.b16 %v1883
        %v1898 = vunpack.c.l.b16 %v1884
        %v1899 = vunpack.c.l.b16 %v1885
        %v1900 = vunpack.c.l.b16 %v1886
        %v1901 = vpack.c.b16 %v1898, %v1897
        %v1902 = vpack.c.b16 %v1900, %v1899
        %v1906 = vsel %vm594, %v1882, 0
        %1908 = vmatprep.subr.bf16.mxu0 0
        %1909 = vmatpush1.bf16.msra.mxu0 %v1901
        %1910 = vmatprep.subr.bf16.mxu0 0
        %1911 = vmatpush1.bf16.msra.mxu0 %v1902
        %1912 = vmatprep.subr.bf16.mxu0 0
        %1913 = vmatpush1.bf16.msra.mxu0 0
        %1914 = vmatprep.subr.bf16.mxu0 0
        %1915 = vmatpush1.bf16.msra.mxu0 0
        %1916 = vmatprep.subr.bf16.mxu0 0
        %1917 = vmatpush1.bf16.msra.mxu0 0
        %1918 = vmatprep.subr.bf16.mxu0 0
        %1919 = vmatpush1.bf16.msra.mxu0 0
        %1920 = vmatprep.subr.bf16.mxu0 0
        %1921 = vmatpush1.bf16.msra.mxu0 0
        %1922 = vmatprep.subr.bf16.mxu0 0
        %1923 = vmatpush1.bf16.msra.mxu0 0
        %1924 = vmatprep.subr.bf16.mxu0 0
        %1925 = vmatpush1.bf16.msra.mxu0 0
        %1926 = vmatprep.subr.bf16.mxu0 0
        %1927 = vmatpush1.bf16.msra.mxu0 0
        %1928 = vmatprep.subr.bf16.mxu0 0
        %1929 = vmatpush1.bf16.msra.mxu0 0
        %1930 = vmatprep.subr.bf16.mxu0 0
        %1931 = vmatpush1.bf16.msra.mxu0 0
        %1932 = vmatprep.subr.bf16.mxu0 0
        %1933 = vmatpush1.bf16.msra.mxu0 0
        %1934 = vmatprep.subr.bf16.mxu0 0
        %1935 = vmatpush1.bf16.msra.mxu0 0
        %1936 = vmatprep.subr.bf16.mxu0 0
        %1937 = vmatpush1.bf16.msra.mxu0 0
        %1938 = vmatprep.subr.bf16.mxu0 0
        %1939 = vmatpush1.bf16.msra.mxu0 0
        %1940 = vmatprep.mubr.bf16.mxu0 0
        %1941 = vmatmul.mubr.bf16.gmra.mrb[0].mxu0 %v1906
        %v1942 = vpop.f32.mrb[0].mxu0
        %v1943 = vadd.f32 %v1891, %v1942
        %v1944 = vpop.f32.mrb[0].mxu0
        %v1945 = vpop.f32.mrb[0].mxu0
        %v1946 = vpop.f32.mrb[0].mxu0
        %1947 = vdwg.mxu0
        %v1948 = vmax.f32 %v1943, 0.0
        %v1949 = vpack.c.bf16 %v1948, %v1948
        %v1950 = vld [vmem:[%s6] sm:$0xf]
        %v1951 = vld [vmem:[%s6 + $0x4] sm:$0xf]
        %v1952 = vld [vmem:[%s6 + $0x8] sm:$0xf]
        %v1953 = vld [vmem:[%s6 + $0xc] sm:$0xf]
        %v1954 = vld [vmem:[%s6 + $0x10] sm:$0xf]
        %v1955 = vld [vmem:[%s6 + $0x14] sm:$0xf]
        %v1956 = vld [vmem:[%s6 + $0x18] sm:$0xf]
        %v1957 = vld [vmem:[%s6 + $0x1c] sm:$0xf]
        %v1958 = vld [vmem:[%s6 + $0x20] sm:$0xf]
        %v1959 = vld [vmem:[%s6 + $0x24] sm:$0xf]
        %v1960 = vld [vmem:[%s6 + $0x28] sm:$0xf]
        %v1961 = vld [vmem:[%s6 + $0x2c] sm:$0xf]
        %v1962 = vld [vmem:[%s6 + $0x30] sm:$0xf]
        %v1963 = vld [vmem:[%s6 + $0x34] sm:$0xf]
        %v1964 = vld [vmem:[%s6 + $0x38] sm:$0xf]
        %v1965 = vld [vmem:[%s6 + $0x3c] sm:$0xf]
        %v1967 = vlaneseq
        %v1968 = vshrl.u32 %v1967, 7
        %v1969 = vsub.s32 0, %v1968
        %v1970 = vrot.slane %v566, %v1969
        %v1988 = vunpack.c.l.b16 %v1950
        %v1989 = vunpack.c.l.b16 %v1951
        %v1990 = vunpack.c.l.b16 %v1952
        %v1991 = vunpack.c.l.b16 %v1953
        %v1992 = vunpack.c.l.b16 %v1954
        %v1993 = vunpack.c.l.b16 %v1955
        %v1994 = vunpack.c.l.b16 %v1956
        %v1995 = vunpack.c.l.b16 %v1957
        %v1996 = vunpack.c.l.b16 %v1958
        %v1997 = vunpack.c.l.b16 %v1959
        %v1998 = vunpack.c.l.b16 %v1960
        %v1999 = vunpack.c.l.b16 %v1961
        %v2000 = vunpack.c.l.b16 %v1962
        %v2001 = vunpack.c.l.b16 %v1963
        %v2002 = vunpack.c.l.b16 %v1964
        %v2003 = vunpack.c.l.b16 %v1965
        %v2004 = vpack.c.b16 %v1989, %v1988
        %v2005 = vpack.c.b16 %v1991, %v1990
        %v2006 = vpack.c.b16 %v1993, %v1992
        %v2007 = vpack.c.b16 %v1995, %v1994
        %v2008 = vpack.c.b16 %v1997, %v1996
        %v2009 = vpack.c.b16 %v1999, %v1998
        %v2010 = vpack.c.b16 %v2001, %v2000
        %v2011 = vpack.c.b16 %v2003, %v2002
        %2020 = vmatprep.subr.bf16.mxu0 0
        %2021 = vmatpush1.bf16.msra.mxu0 %v2004
        %2022 = vmatprep.subr.bf16.mxu0 0
        %2023 = vmatpush1.bf16.msra.mxu0 %v2005
        %2024 = vmatprep.subr.bf16.mxu0 0
        %2025 = vmatpush1.bf16.msra.mxu0 %v2006
        %2026 = vmatprep.subr.bf16.mxu0 0
        %2027 = vmatpush1.bf16.msra.mxu0 %v2007
        %2028 = vmatprep.subr.bf16.mxu0 0
        %2029 = vmatpush1.bf16.msra.mxu0 %v2008
        %2030 = vmatprep.subr.bf16.mxu0 0
        %2031 = vmatpush1.bf16.msra.mxu0 %v2009
        %2032 = vmatprep.subr.bf16.mxu0 0
        %2033 = vmatpush1.bf16.msra.mxu0 %v2010
        %2034 = vmatprep.subr.bf16.mxu0 0
        %2035 = vmatpush1.bf16.msra.mxu0 %v2011
        %2036 = vmatprep.subr.bf16.mxu0 0
        %2037 = vmatpush1.bf16.msra.mxu0 0
        %2038 = vmatprep.subr.bf16.mxu0 0
        %2039 = vmatpush1.bf16.msra.mxu0 0
        %2040 = vmatprep.subr.bf16.mxu0 0
        %2041 = vmatpush1.bf16.msra.mxu0 0
        %2042 = vmatprep.subr.bf16.mxu0 0
        %2043 = vmatpush1.bf16.msra.mxu0 0
        %2044 = vmatprep.subr.bf16.mxu0 0
        %2045 = vmatpush1.bf16.msra.mxu0 0
        %2046 = vmatprep.subr.bf16.mxu0 0
        %2047 = vmatpush1.bf16.msra.mxu0 0
        %2048 = vmatprep.subr.bf16.mxu0 0
        %2049 = vmatpush1.bf16.msra.mxu0 0
        %2050 = vmatprep.subr.bf16.mxu0 0
        %2051 = vmatpush1.bf16.msra.mxu0 0
        %2052 = vmatprep.mubr.bf16.mxu0 0
        %2053 = vmatmul.mubr.bf16.gmra.mrb[0].mxu0 %v1949
        %v2054 = vpop.f32.mrb[0].mxu0
        %v2055 = vadd.f32 %v1970, %v2054
        %v2056 = vpop.f32.mrb[0].mxu0
        %v2057 = vpop.f32.mrb[0].mxu0
        %v2058 = vpop.f32.mrb[0].mxu0
        %2059 = vdwg.mxu0
        %v2060 = vadd.f32 %v1881, %v2055
        %v2061 = vsel %vm594, %v2060, 0.0
        %2062 = vadd.xlane.f32.xlu0 %v2061
        %v2063 = vpop.xlane.xlu0 %2062
        %v2064 = vmul.f32 %v2063, %v1857
        %v2065 = vsub.f32 %v2060, %v2064
        %v2066 = vmul.f32 %v2065, %v2065
        %v2067 = vsel %vm594, %v2066, 0.0
        %2068 = vadd.xlane.f32.xlu0 %v2067
        %v2069 = vpop.xlane.xlu0 %2068
        %v2070 = vmul.f32 %v2069, %v1857
        %v2071 = vadd.f32 %v2070, 1e-05
        %v2072 = vrsqrt.pop %v2071
        %v2073 = vmul.f32 %v2065, %v2072
        %v2075 = vlaneseq
        %v2076 = vshrl.u32 %v2075, 7
        %v2077 = vsub.s32 0, %v2076
        %v2078 = vrot.slane %v569, %v2077
        %v2080 = vmul.f32 %v2073, %v2078
        %v2082 = vlaneseq
        %v2083 = vshrl.u32 %v2082, 7
        %v2084 = vsub.s32 0, %v2083
        %v2085 = vrot.slane %v570, %v2084
        %v2087 = vadd.f32 %v2080, %v2085
        %2088 = vst.msk [vmem:[%s554] sm:$0xff] %vm594, %v2087
        %s2089 = sand.u32 %s402, 1
        %s2090 = scalar_lea.sflag [#allocation4], %s2089
        %s2091 = sand.u32 %s402, 1
        %s2092 = smul.addr %s2091, 8
        %s2093 = scalar_lea.vmem [#allocation5], %s2092
        // Predicated region
        $region93: #{tpu_custom_call.1} parent=87 // pred_check
          %p2094 = pneg %p412
        $region94: #{tpu_custom_call.1} parent=87 // pred_check_branch
          %2096 = sbr.rel (%p2094) target = $region96
        $region95: #{tpu_custom_call.1} parent=87 // pred_region
          %s2098 = ssub.s32 128, 128
          %2099 = vsyncadd %s2090, %s2098
          %s2100 = smul.addr %s32, 128
          %s2101 = scalar_lea.hbm %s17, %s2100
          %s2103 = sshll.u32 %s2093, 4
          %s2104 = int_to_ptr.vmem [resolvable:$true] %s2103
          %2106 = dma.vmem_to_hbm [thread:$0]  %s2104, 128, %s2101, %s2090
        $region96: #{tpu_custom_call.1} parent=87 // pred_fallthru
          _
      $region88: #{tpu_custom_call.1} parent=5 // pred_fallthru
        _
      %p2107 = scmp.le.s32.totalorder 2, %s27
      // Predicated region
      $region97: #{tpu_custom_call.1} parent=5 // pred_check
        %p2108 = pneg %p2107
      $region98: #{tpu_custom_call.1} parent=5 // pred_check_branch
        %2110 = sbr.rel (%p2108) target = $region100
      $region99: #{tpu_custom_call.1} parent=5 // pred_region
        %s2111 = ssub.s32 %s27, 2
        // Predicated region
        $region101: #{tpu_custom_call.1} parent=99 // pred_check
          %p2112 = pneg %p418
        $region102: #{tpu_custom_call.1} parent=99 // pred_check_branch
          %2114 = sbr.rel (%p2112) target = $region104
        $region103: #{tpu_custom_call.1} parent=99 // pred_region
          %s2115 = sand.u32 %s403, 1
          %s2116 = scalar_lea.sflag [#allocation4], %s2115
          %s2117 = sand.u32 %s403, 1
          %s2118 = smul.addr %s2117, 8
          %s2119 = scalar_lea.vmem [#allocation5], %s2118
          %2120 = dma.done %s2116, 128
        $region104: #{tpu_custom_call.1} parent=99 // pred_fallthru
          _
      $region100: #{tpu_custom_call.1} parent=5 // pred_fallthru
        _
    $region6: #{tpu_custom_call.1} parent=1 // loop_footer
      %s31 = sadd.s32 1, %s27
    $region7: #{tpu_custom_call.1} parent=1 // loop_footer_branch
      %26 = sbr.rel target = $region3
    $region8: #{tpu_custom_call.1} parent=1 // loop_exit
      _
    %2121 = vsyncpa [#allocation3], 1
    %s2122 = scalar_lea.sflag [#allocation3], 1
    %2123 = vsyncpa %s2122, 1
    %2124 = vsyncpa [#allocation4], 1
    %s2125 = scalar_lea.sflag [#allocation4], 1
    %2126 = vsyncpa %s2125, 1

</llo_original>
